<compile_context>
chip_gen: v6e
topology: v6e:2x2x1
jax: 0.10.0
libtpu: 0.0.40
codegen_flags: <defaults>
</compile_context>

<pallas_src>
import functools

import jax
import jax.numpy as jnp
from jax.experimental import pallas as pl
from jax.experimental.pallas import tpu as pltpu


# ----------------------------------------------------------------------------
# Pallas kernel: gradient + Hessian of the Poisson log-likelihood for a block
# of ROIs (the logL scalar itself is unused by the LM update and is skipped).
#   smp_ref, mu_ref : [TB, S]       (batch on sublanes, samples on lanes)
#   jac_ref         : [NP, TB, S]   (param-major so jac_ref[k] is one tile)
#   grad_ref        : [TB, NP]
#   hess_ref        : [TB, NP*NP]   (row-major 5x5, symmetric)
# ----------------------------------------------------------------------------
def grad_hess_kernel(smp_ref, mu_ref, jac_ref, grad_ref, hess_ref, *, np_):
    keps = 1000.0 * 2.220446049250313e-16  # same constant as the torch code
    img = smp_ref[...]          # [TB, S]
    mu = mu_ref[...]            # [TB, S]

    # mupos = (mu > 0) * mu + (mu < 0) * keps   (mu == 0 -> 0, exactly as torch)
    mupos = jnp.where(mu > 0, mu, jnp.where(mu < 0, keps, 0.0))
    inv = pl.reciprocal(mupos, approx=True)          # EUP, off the VALU
    weight = (img - mupos) * inv                     # (image - mupos) / mupos
    dweight = (weight + 1.0) * inv                   # == image / mupos**2

    # grad[b, i]    = sum_s weight[b, s] * jac[i, b, s]
    # hess[b, i, j] = -sum_s dweight[b, s] * jac[i, b, s] * jac[j, b, s]
    # VPU multiplies + XLU lane reductions, vectorized over the TB batch rows.
    # jac_ref[i] is loaded once per i and reused for grad[i] and jd_i.
    for i in range(np_):
        ji = jac_ref[i]                                               # [TB, S]
        grad_ref[:, i:i + 1] = jnp.sum(weight * ji, axis=-1, keepdims=True)
        jd_i = dweight * ji                                           # [TB, S]
        for j in range(i, np_):
            jj = ji if j == i else jac_ref[j]
            h = -jnp.sum(jd_i * jj, axis=-1, keepdims=True)           # [TB, 1]
            hess_ref[:, i * np_ + j: i * np_ + j + 1] = h
            if j != i:
                hess_ref[:, j * np_ + i: j * np_ + i + 1] = h


def grad_hess_pallas(smp_f, mu_f, jac_f, tb_max=128):
    """smp_f, mu_f: [B, S] float32; jac_f: [NP, B, S] float32 (param-major)."""
    B, S = smp_f.shape
    np_ = jac_f.shape[0]

    # Batch tile: multiple of 8 (sublanes), capped at 128.  Pad the batch up to
    # a multiple of tb; padded rows get mu = 1 so every intermediate stays
    # finite, and they are sliced off below.
    tb = min(tb_max, ((B + 7) // 8) * 8)
    b_pad = ((B + tb - 1) // tb) * tb
    if b_pad != B:
        pad = b_pad - B
        smp_f = jnp.pad(smp_f, ((0, pad), (0, 0)))
        mu_f = jnp.pad(mu_f, ((0, pad), (0, 0)), constant_values=1.0)
        jac_f = jnp.pad(jac_f, ((0, 0), (0, pad), (0, 0)))

    grid_spec = pltpu.PrefetchScalarGridSpec(
        num_scalar_prefetch=0,
        grid=(b_pad // tb,),
        in_specs=[
            pl.BlockSpec((tb, S), lambda b: (b, 0)),
            pl.BlockSpec((tb, S), lambda b: (b, 0)),
            pl.BlockSpec((np_, tb, S), lambda b: (0, b, 0)),
        ],
        out_specs=(
            pl.BlockSpec((tb, np_), lambda b: (b, 0)),
            pl.BlockSpec((tb, np_ * np_), lambda b: (b, 0)),
        ),
    )
    out_shape = (
        jax.ShapeDtypeStruct((b_pad, np_), jnp.float32),
        jax.ShapeDtypeStruct((b_pad, np_ * np_), jnp.float32),
    )
    cost = pl.CostEstimate(
        flops=int(b_pad) * int(S) * (2 * np_ * (np_ + 1) + 3 * np_ + 6),
        transcendentals=int(b_pad) * int(S),
        bytes_accessed=4 * (int(b_pad) * int(S) * (np_ + 2)
                            + int(b_pad) * (np_ + np_ * np_)),
    )
    grad, hess = pl.pallas_call(
        functools.partial(grad_hess_kernel, np_=np_),
        out_shape=out_shape,
        grid_spec=grid_spec,
        compiler_params=pltpu.CompilerParams(dimension_semantics=("parallel",)),
        cost_estimate=cost,
    )(smp_f, mu_f, jac_f)
    return grad[:B], hess[:B].reshape(B, np_, np_)


# ----------------------------------------------------------------------------
# Deterministic surrogate PSF model (replaces the vectorial-PSF `model`).
# theta = [x, y, z, I, bg]; simflux modulation rows mod[p] = [kx, ky, depth, phase, rel]
# Returns mu [B, P, H, W] and a PARAM-MAJOR Jacobian [NP, B, P, H, W] so the
# kernel input [NP, B, S] is a contiguous reshape (no XLA transpose of jac).
# ----------------------------------------------------------------------------
def _psf_single(theta, mod_b, roipos_b, H, W):
    x0, y0, z, inten, bg = theta[0], theta[1], theta[2], theta[3], theta[4]
    yy = jnp.arange(H, dtype=jnp.float32)[:, None]
    xx = jnp.arange(W, dtype=jnp.float32)[None, :]
    sigma0 = 1.6
    sx = sigma0 * (1.0 + (z - 0.25) ** 2)
    sy = sigma0 * (1.0 + (z + 0.25) ** 2)
    g = jnp.exp(-((xx - x0) ** 2) / (2.0 * sx * sx)
                - ((yy - y0) ** 2) / (2.0 * sy * sy))
    g = g / (2.0 * jnp.pi * sx * sy)
    ph = mod_b[:, 0] * (x0 + roipos_b[1]) + mod_b[:, 1] * (y0 + roipos_b[0]) + mod_b[:, 3]
    m = mod_b[:, 4] * (1.0 + mod_b[:, 2] * jnp.sin(ph))          # [P]
    mu = bg + inten * m[:, None, None] * g[None, :, :]           # [P, H, W]
    return mu


def make_model(H, W):
    single = functools.partial(_psf_single, H=H, W=W)
    batched = jax.vmap(single)     # (B,5),(B,P,5),(B,2) -> (B,P,H,W)

    def model_fn(cur, mod, roipos):
        mu, lin = jax.linearize(lambda c: batched(c, mod, roipos), cur)
        eye = jnp.eye(cur.shape[1], dtype=cur.dtype)
        jac = jax.vmap(lambda t: lin(jnp.broadcast_to(t, cur.shape)))(eye)
        return mu, jac             # mu: [B,P,H,W], jac: [NP,B,P,H,W]

    return model_fn


# ----------------------------------------------------------------------------
# LM_MLE_simflux (JAX port of the torch module; ibg_only=False path)
# ----------------------------------------------------------------------------
class LM_MLE_simflux:
    def __init__(self, model, param_range_min_max, iterations, lambda_, tol):
        self.model = model
        self.param_range_min_max = jnp.asarray(param_range_min_max, jnp.float32)
        self.iterations = int(iterations)
        self.lambda_ = float(lambda_)
        self.tol = jnp.asarray(tol, jnp.float32)

    def _mle_update(self, cur, mu, jac, smp, good):
        B, Kp = cur.shape
        S = smp.shape[1] * smp.shape[2] * smp.shape[3]
        smp_f = smp.reshape(B, S)
        mu_f = mu.reshape(B, S)
        jac_f = jac.reshape(Kp, B, S)           # param-major, contiguous reshape

        # merit (logL) is computed but unused in the torch LM update; skipped here.
        grad, hess = grad_hess_pallas(smp_f, mu_f, jac_f)

        diag = jnp.diagonal(hess, axis1=-2, axis2=-1)                  # [B, Kp]
        diag_full = diag[:, :, None] * jnp.eye(Kp, dtype=jnp.float32)  # [B, Kp, Kp]
        Bmat = hess + self.lambda_ * diag_full
        # TODO(synk): torch wraps the solve in try/except; here singular systems
        # yield inf/nan and only NaNs are replaced (matching the explicit nan fixup).
        dtheta = jnp.linalg.solve(-Bmat, grad[..., None])[..., 0]
        dtheta = jnp.where(jnp.isnan(dtheta), -0.1 * cur, dtheta)
        new_cur = cur + dtheta
        new_cur = jnp.maximum(new_cur, self.param_range_min_max[None, :, 0])
        new_cur = jnp.minimum(new_cur, self.param_range_min_max[None, :, 1])
        return jnp.where(good[:, None], new_cur, cur)

    def forward(self, smp, thetatry, mod, roipos):
        cur = jnp.asarray(thetatry, jnp.float32)
        smp = jnp.asarray(smp, jnp.float32)
        mod = jnp.asarray(mod, jnp.float32)
        roipos = jnp.asarray(roipos, jnp.float32)

        B, Kp = cur.shape
        mu = jnp.zeros(smp.shape, jnp.float32)
        jac = jnp.zeros((Kp,) + smp.shape, jnp.float32)

        traces = jnp.zeros((self.iterations + 1, B, Kp), jnp.float32)
        traces = traces.at[0].set(cur)
        tol = jnp.ones((B, Kp), jnp.float32) * self.tol[None, :]
        good = jnp.ones((B,), bool)
        delta = jnp.ones((B, Kp), jnp.float32)
        bool_array = jnp.ones((B, Kp), bool)

        # early-exit (flag_tolerance) is emulated by masking with `good`; once all
        # rows converge every further iteration is a no-op, matching torch output.
        for i in range(self.iterations):
            mu_new, jac_new = self.model(cur, mod, roipos)
            mu = jnp.where(good[:, None, None, None], mu_new, mu)
            jac = jnp.where(good[None, :, None, None, None], jac_new, jac)

            cur = self._mle_update(cur, mu, jac, smp, good)

            traces = traces.at[i + 1].set(jnp.where(good[:, None], cur, traces[i + 1]))
            # note: torch uses traces[i-1] - traces[i]; at i=0 this is traces[-1]
            delta_new = jnp.abs(traces[i - 1] - traces[i])
            delta = jnp.where(good[:, None], delta_new, delta)
            bool_array = jnp.where(good[:, None], delta < tol, bool_array)
            test = jnp.sum(bool_array, axis=1)
            good = test != 5

        chisq = (smp - mu) ** 2 / mu
        return cur, traces, chisq


# ----------------------------------------------------------------------------
# main
# ----------------------------------------------------------------------------
if __name__ == "__main__":
    key = jax.random.PRNGKey(0)
    B, P, H, W = 4, 3, 16, 16     # batch, simflux patterns, ROI size
    Kp = 5                        # [x, y, z, I, bg]

    k1, k2, k3 = jax.random.split(key, 3)
    x_gt = 7.5 + jax.random.uniform(k1, (B,), minval=-1.0, maxval=1.0)
    y_gt = 7.5 + jax.random.uniform(k2, (B,), minval=-1.0, maxval=1.0)
    z_gt = jax.random.uniform(k3, (B,), minval=-0.3, maxval=0.3)
    I_gt = 1000.0 * jnp.ones((B,), jnp.float32)
    bg_gt = 5.0 * jnp.ones((B,), jnp.float32)
    theta_gt = jnp.stack([x_gt, y_gt, z_gt, I_gt, bg_gt], axis=1).astype(jnp.float32)

    angs = jnp.array([0.0, 2.0 * jnp.pi / 3.0, 4.0 * jnp.pi / 3.0], jnp.float32)
    kmag = 1.8
    mod = jnp.stack([kmag * jnp.cos(angs), kmag * jnp.sin(angs),
                     0.9 * jnp.ones(3), angs, jnp.ones(3) / 3.0], axis=1)  # [P, 5]
    mod = jnp.broadcast_to(mod, (B, P, 5)).astype(jnp.float32)
    roipos = jnp.zeros((B, 2), jnp.float32)

    model_fn = make_model(H, W)
    smp, _ = model_fn(theta_gt, mod, roipos)          # noiseless simflux "measurement"

    thetatry = theta_gt * jnp.array([1.0, 1.0, 1.0, 0.8, 1.2], jnp.float32) \
        + jnp.array([0.5, -0.5, 0.1, 0.0, 0.0], jnp.float32)

    param_range = jnp.array([[2.0, 13.0],
                             [2.0, 13.0],
                             [-1.0, 1.0],
                             [1.0, 1.0e5],
                             [0.1, 100.0]], jnp.float32)
    tol = jnp.full((Kp,), 1e-4, jnp.float32)

    mle = LM_MLE_simflux(model_fn, param_range, iterations=6, lambda_=0.01, tol=tol)
    forward_jit = jax.jit(mle.forward)
    cur, traces, chisq = forward_jit(smp, thetatry, mod, roipos)
    (cur, traces, chisq) = jax.block_until_ready((cur, traces, chisq))

    assert cur.shape == (B, Kp)
    assert traces.shape == (mle.iterations + 1, B, Kp)
    assert chisq.shape == (B, P, H, W)
    assert bool(jnp.all(jnp.isfinite(cur)))
    assert bool(jnp.all(jnp.isfinite(chisq)))
    print("KERNEL_OK")
</pallas_src>

<mosaic_0001>
module attributes {stable_mosaic.version = 11 : i64} {
  func.func @grad_hess_kernel(%arg0: i32, %arg1: memref<8x768xf32, #tpu.memory_space<vmem>>, %arg2: memref<8x768xf32, #tpu.memory_space<vmem>>, %arg3: memref<5x8x768xf32, #tpu.memory_space<vmem>>, %arg4: memref<8x5xf32, #tpu.memory_space<vmem>>, %arg5: memref<8x25xf32, #tpu.memory_space<vmem>>) attributes {dimension_semantics = [#tpu.dimension_semantics<parallel>], iteration_bounds = array<i64: 1>, scalar_prefetch = 0 : i64, scratch_operands = 0 : i64, tpu.core_type = #tpu.core_type<tc>, window_params = [{transform_indices = @transform_0, window_bounds = array<i64: 8, 768>}, {transform_indices = @transform_1, window_bounds = array<i64: 8, 768>}, {transform_indices = @transform_2, window_bounds = array<i64: 5, 8, 768>}, {transform_indices = @transform_3, window_bounds = array<i64: 8, 5>}, {transform_indices = @transform_4, window_bounds = array<i64: 8, 25>}]} {
    %c0 = arith.constant 0 : index
    %c0_0 = arith.constant 0 : index
    %0 = vector.load %arg1[%c0, %c0_0] : memref<8x768xf32, #tpu.memory_space<vmem>>, vector<8x768xf32>
    %c0_1 = arith.constant 0 : index
    %c0_2 = arith.constant 0 : index
    %1 = vector.load %arg2[%c0_1, %c0_2] : memref<8x768xf32, #tpu.memory_space<vmem>>, vector<8x768xf32>
    %cst = arith.constant 0.000000e+00 : f32
    %2 = vector.broadcast %cst : f32 to vector<8x768xf32>
    %3 = arith.cmpf ogt, %1, %2 : vector<8x768xf32>
    %cst_3 = arith.constant 0.000000e+00 : f32
    %4 = vector.broadcast %cst_3 : f32 to vector<8x768xf32>
    %5 = arith.cmpf olt, %1, %4 : vector<8x768xf32>
    %cst_4 = arith.constant 2.22044605E-13 : f32
    %cst_5 = arith.constant 0.000000e+00 : f32
    %6 = vector.broadcast %cst_4 : f32 to vector<8x768xf32>
    %7 = vector.broadcast %cst_5 : f32 to vector<8x768xf32>
    %8 = arith.select %5, %6, %7 : vector<8x768xi1>, vector<8x768xf32>
    %9 = arith.select %3, %1, %8 : vector<8x768xi1>, vector<8x768xf32>
    %10 = tpu.reciprocal %9 {approx = true} : vector<8x768xf32> -> vector<8x768xf32>
    %11 = arith.subf %0, %9 : vector<8x768xf32>
    %12 = arith.mulf %11, %10 : vector<8x768xf32>
    %cst_6 = arith.constant 1.000000e+00 : f32
    %13 = vector.broadcast %cst_6 : f32 to vector<8x768xf32>
    %14 = arith.addf %12, %13 : vector<8x768xf32>
    %15 = arith.mulf %14, %10 : vector<8x768xf32>
    %c0_7 = arith.constant 0 : index
    %c0_8 = arith.constant 0 : index
    %c0_9 = arith.constant 0 : index
    %16 = vector.load %arg3[%c0_7, %c0_8, %c0_9] : memref<5x8x768xf32, #tpu.memory_space<vmem>>, vector<1x8x768xf32>
    %17 = vector.shape_cast %16 : vector<1x8x768xf32> to vector<8x768xf32>
    %18 = arith.mulf %12, %17 : vector<8x768xf32>
    %cst_10 = arith.constant dense<0.000000e+00> : vector<8xf32>
    %19 = vector.multi_reduction <add>, %18, %cst_10 [1] : vector<8x768xf32> to vector<8xf32>
    %20 = vector.shape_cast %19 : vector<8xf32> to vector<8x1xf32>
    %c0_11 = arith.constant 0 : index
    %c0_12 = arith.constant 0 : index
    %21 = vector.load %arg4[%c0_11, %c0_12] : memref<8x5xf32, #tpu.memory_space<vmem>>, vector<8x1xf32>
    tpu.vector_store %arg4[%c0_11, %c0_12], %20 {strides = array<i32>} : memref<8x5xf32, #tpu.memory_space<vmem>>, vector<8x1xf32>,
    %22 = arith.mulf %15, %17 : vector<8x768xf32>
    %23 = arith.mulf %22, %17 : vector<8x768xf32>
    %cst_13 = arith.constant dense<0.000000e+00> : vector<8xf32>
    %24 = vector.multi_reduction <add>, %23, %cst_13 [1] : vector<8x768xf32> to vector<8xf32>
    %25 = vector.shape_cast %24 : vector<8xf32> to vector<8x1xf32>
    %cst_14 = arith.constant 0.000000e+00 : f32
    %26 = vector.broadcast %cst_14 : f32 to vector<8x1xf32>
    %27 = arith.subf %26, %25 : vector<8x1xf32>
    %c0_15 = arith.constant 0 : index
    %c0_16 = arith.constant 0 : index
    %28 = vector.load %arg5[%c0_15, %c0_16] : memref<8x25xf32, #tpu.memory_space<vmem>>, vector<8x1xf32>
    tpu.vector_store %arg5[%c0_15, %c0_16], %27 {strides = array<i32>} : memref<8x25xf32, #tpu.memory_space<vmem>>, vector<8x1xf32>,
    %c1 = arith.constant 1 : index
    %c0_17 = arith.constant 0 : index
    %c0_18 = arith.constant 0 : index
    %29 = vector.load %arg3[%c1, %c0_17, %c0_18] : memref<5x8x768xf32, #tpu.memory_space<vmem>>, vector<1x8x768xf32>
    %30 = vector.shape_cast %29 : vector<1x8x768xf32> to vector<8x768xf32>
    %31 = arith.mulf %22, %30 : vector<8x768xf32>
    %cst_19 = arith.constant dense<0.000000e+00> : vector<8xf32>
    %32 = vector.multi_reduction <add>, %31, %cst_19 [1] : vector<8x768xf32> to vector<8xf32>
    %33 = vector.shape_cast %32 : vector<8xf32> to vector<8x1xf32>
    %cst_20 = arith.constant 0.000000e+00 : f32
    %34 = vector.broadcast %cst_20 : f32 to vector<8x1xf32>
    %35 = arith.subf %34, %33 : vector<8x1xf32>
    %c0_21 = arith.constant 0 : index
    %c1_22 = arith.constant 1 : index
    %36 = vector.load %arg5[%c0_21, %c1_22] : memref<8x25xf32, #tpu.memory_space<vmem>>, vector<8x1xf32>
    tpu.vector_store %arg5[%c0_21, %c1_22], %35 {strides = array<i32>} : memref<8x25xf32, #tpu.memory_space<vmem>>, vector<8x1xf32>,
    %c0_23 = arith.constant 0 : index
    %c5 = arith.constant 5 : index
    %37 = vector.load %arg5[%c0_23, %c5] : memref<8x25xf32, #tpu.memory_space<vmem>>, vector<8x1xf32>
    tpu.vector_store %arg5[%c0_23, %c5], %35 {strides = array<i32>} : memref<8x25xf32, #tpu.memory_space<vmem>>, vector<8x1xf32>,
    %c2 = arith.constant 2 : index
    %c0_24 = arith.constant 0 : index
    %c0_25 = arith.constant 0 : index
    %38 = vector.load %arg3[%c2, %c0_24, %c0_25] : memref<5x8x768xf32, #tpu.memory_space<vmem>>, vector<1x8x768xf32>
    %39 = vector.shape_cast %38 : vector<1x8x768xf32> to vector<8x768xf32>
    %40 = arith.mulf %22, %39 : vector<8x768xf32>
    %cst_26 = arith.constant dense<0.000000e+00> : vector<8xf32>
    %41 = vector.multi_reduction <add>, %40, %cst_26 [1] : vector<8x768xf32> to vector<8xf32>
    %42 = vector.shape_cast %41 : vector<8xf32> to vector<8x1xf32>
    %cst_27 = arith.constant 0.000000e+00 : f32
    %43 = vector.broadcast %cst_27 : f32 to vector<8x1xf32>
    %44 = arith.subf %43, %42 : vector<8x1xf32>
    %c0_28 = arith.constant 0 : index
    %c2_29 = arith.constant 2 : index
    %45 = vector.load %arg5[%c0_28, %c2_29] : memref<8x25xf32, #tpu.memory_space<vmem>>, vector<8x1xf32>
    tpu.vector_store %arg5[%c0_28, %c2_29], %44 {strides = array<i32>} : memref<8x25xf32, #tpu.memory_space<vmem>>, vector<8x1xf32>,
    %c0_30 = arith.constant 0 : index
    %c10 = arith.constant 10 : index
    %46 = vector.load %arg5[%c0_30, %c10] : memref<8x25xf32, #tpu.memory_space<vmem>>, vector<8x1xf32>
    tpu.vector_store %arg5[%c0_30, %c10], %44 {strides = array<i32>} : memref<8x25xf32, #tpu.memory_space<vmem>>, vector<8x1xf32>,
    %c3 = arith.constant 3 : index
    %c0_31 = arith.constant 0 : index
    %c0_32 = arith.constant 0 : index
    %47 = vector.load %arg3[%c3, %c0_31, %c0_32] : memref<5x8x768xf32, #tpu.memory_space<vmem>>, vector<1x8x768xf32>
    %48 = vector.shape_cast %47 : vector<1x8x768xf32> to vector<8x768xf32>
    %49 = arith.mulf %22, %48 : vector<8x768xf32>
    %cst_33 = arith.constant dense<0.000000e+00> : vector<8xf32>
    %50 = vector.multi_reduction <add>, %49, %cst_33 [1] : vector<8x768xf32> to vector<8xf32>
    %51 = vector.shape_cast %50 : vector<8xf32> to vector<8x1xf32>
    %cst_34 = arith.constant 0.000000e+00 : f32
    %52 = vector.broadcast %cst_34 : f32 to vector<8x1xf32>
    %53 = arith.subf %52, %51 : vector<8x1xf32>
    %c0_35 = arith.constant 0 : index
    %c3_36 = arith.constant 3 : index
    %54 = vector.load %arg5[%c0_35, %c3_36] : memref<8x25xf32, #tpu.memory_space<vmem>>, vector<8x1xf32>
    tpu.vector_store %arg5[%c0_35, %c3_36], %53 {strides = array<i32>} : memref<8x25xf32, #tpu.memory_space<vmem>>, vector<8x1xf32>,
    %c0_37 = arith.constant 0 : index
    %c15 = arith.constant 15 : index
    %55 = vector.load %arg5[%c0_37, %c15] : memref<8x25xf32, #tpu.memory_space<vmem>>, vector<8x1xf32>
    tpu.vector_store %arg5[%c0_37, %c15], %53 {strides = array<i32>} : memref<8x25xf32, #tpu.memory_space<vmem>>, vector<8x1xf32>,
    %c4 = arith.constant 4 : index
    %c0_38 = arith.constant 0 : index
    %c0_39 = arith.constant 0 : index
    %56 = vector.load %arg3[%c4, %c0_38, %c0_39] : memref<5x8x768xf32, #tpu.memory_space<vmem>>, vector<1x8x768xf32>
    %57 = vector.shape_cast %56 : vector<1x8x768xf32> to vector<8x768xf32>
    %58 = arith.mulf %22, %57 : vector<8x768xf32>
    %cst_40 = arith.constant dense<0.000000e+00> : vector<8xf32>
    %59 = vector.multi_reduction <add>, %58, %cst_40 [1] : vector<8x768xf32> to vector<8xf32>
    %60 = vector.shape_cast %59 : vector<8xf32> to vector<8x1xf32>
    %cst_41 = arith.constant 0.000000e+00 : f32
    %61 = vector.broadcast %cst_41 : f32 to vector<8x1xf32>
    %62 = arith.subf %61, %60 : vector<8x1xf32>
    %c0_42 = arith.constant 0 : index
    %c4_43 = arith.constant 4 : index
    %63 = vector.load %arg5[%c0_42, %c4_43] : memref<8x25xf32, #tpu.memory_space<vmem>>, vector<8x1xf32>
    tpu.vector_store %arg5[%c0_42, %c4_43], %62 {strides = array<i32>} : memref<8x25xf32, #tpu.memory_space<vmem>>, vector<8x1xf32>,
    %c0_44 = arith.constant 0 : index
    %c20 = arith.constant 20 : index
    %64 = vector.load %arg5[%c0_44, %c20] : memref<8x25xf32, #tpu.memory_space<vmem>>, vector<8x1xf32>
    tpu.vector_store %arg5[%c0_44, %c20], %62 {strides = array<i32>} : memref<8x25xf32, #tpu.memory_space<vmem>>, vector<8x1xf32>,
    %c1_45 = arith.constant 1 : index
    %c0_46 = arith.constant 0 : index
    %c0_47 = arith.constant 0 : index
    %65 = vector.load %arg3[%c1_45, %c0_46, %c0_47] : memref<5x8x768xf32, #tpu.memory_space<vmem>>, vector<1x8x768xf32>
    %66 = vector.shape_cast %65 : vector<1x8x768xf32> to vector<8x768xf32>
    %67 = arith.mulf %12, %66 : vector<8x768xf32>
    %cst_48 = arith.constant dense<0.000000e+00> : vector<8xf32>
    %68 = vector.multi_reduction <add>, %67, %cst_48 [1] : vector<8x768xf32> to vector<8xf32>
    %69 = vector.shape_cast %68 : vector<8xf32> to vector<8x1xf32>
    %c0_49 = arith.constant 0 : index
    %c1_50 = arith.constant 1 : index
    %70 = vector.load %arg4[%c0_49, %c1_50] : memref<8x5xf32, #tpu.memory_space<vmem>>, vector<8x1xf32>
    tpu.vector_store %arg4[%c0_49, %c1_50], %69 {strides = array<i32>} : memref<8x5xf32, #tpu.memory_space<vmem>>, vector<8x1xf32>,
    %71 = arith.mulf %15, %66 : vector<8x768xf32>
    %72 = arith.mulf %71, %66 : vector<8x768xf32>
    %cst_51 = arith.constant dense<0.000000e+00> : vector<8xf32>
    %73 = vector.multi_reduction <add>, %72, %cst_51 [1] : vector<8x768xf32> to vector<8xf32>
    %74 = vector.shape_cast %73 : vector<8xf32> to vector<8x1xf32>
    %cst_52 = arith.constant 0.000000e+00 : f32
    %75 = vector.broadcast %cst_52 : f32 to vector<8x1xf32>
    %76 = arith.subf %75, %74 : vector<8x1xf32>
    %c0_53 = arith.constant 0 : index
    %c6 = arith.constant 6 : index
    %77 = vector.load %arg5[%c0_53, %c6] : memref<8x25xf32, #tpu.memory_space<vmem>>, vector<8x1xf32>
    tpu.vector_store %arg5[%c0_53, %c6], %76 {strides = array<i32>} : memref<8x25xf32, #tpu.memory_space<vmem>>, vector<8x1xf32>,
    %c2_54 = arith.constant 2 : index
    %c0_55 = arith.constant 0 : index
    %c0_56 = arith.constant 0 : index
    %78 = vector.load %arg3[%c2_54, %c0_55, %c0_56] : memref<5x8x768xf32, #tpu.memory_space<vmem>>, vector<1x8x768xf32>
    %79 = vector.shape_cast %78 : vector<1x8x768xf32> to vector<8x768xf32>
    %80 = arith.mulf %71, %79 : vector<8x768xf32>
    %cst_57 = arith.constant dense<0.000000e+00> : vector<8xf32>
    %81 = vector.multi_reduction <add>, %80, %cst_57 [1] : vector<8x768xf32> to vector<8xf32>
    %82 = vector.shape_cast %81 : vector<8xf32> to vector<8x1xf32>
    %cst_58 = arith.constant 0.000000e+00 : f32
    %83 = vector.broadcast %cst_58 : f32 to vector<8x1xf32>
    %84 = arith.subf %83, %82 : vector<8x1xf32>
    %c0_59 = arith.constant 0 : index
    %c7 = arith.constant 7 : index
    %85 = vector.load %arg5[%c0_59, %c7] : memref<8x25xf32, #tpu.memory_space<vmem>>, vector<8x1xf32>
    tpu.vector_store %arg5[%c0_59, %c7], %84 {strides = array<i32>} : memref<8x25xf32, #tpu.memory_space<vmem>>, vector<8x1xf32>,
    %c0_60 = arith.constant 0 : index
    %c11 = arith.constant 11 : index
    %86 = vector.load %arg5[%c0_60, %c11] : memref<8x25xf32, #tpu.memory_space<vmem>>, vector<8x1xf32>
    tpu.vector_store %arg5[%c0_60, %c11], %84 {strides = array<i32>} : memref<8x25xf32, #tpu.memory_space<vmem>>, vector<8x1xf32>,
    %c3_61 = arith.constant 3 : index
    %c0_62 = arith.constant 0 : index
    %c0_63 = arith.constant 0 : index
    %87 = vector.load %arg3[%c3_61, %c0_62, %c0_63] : memref<5x8x768xf32, #tpu.memory_space<vmem>>, vector<1x8x768xf32>
    %88 = vector.shape_cast %87 : vector<1x8x768xf32> to vector<8x768xf32>
    %89 = arith.mulf %71, %88 : vector<8x768xf32>
    %cst_64 = arith.constant dense<0.000000e+00> : vector<8xf32>
    %90 = vector.multi_reduction <add>, %89, %cst_64 [1] : vector<8x768xf32> to vector<8xf32>
    %91 = vector.shape_cast %90 : vector<8xf32> to vector<8x1xf32>
    %cst_65 = arith.constant 0.000000e+00 : f32
    %92 = vector.broadcast %cst_65 : f32 to vector<8x1xf32>
    %93 = arith.subf %92, %91 : vector<8x1xf32>
    %c0_66 = arith.constant 0 : index
    %c8 = arith.constant 8 : index
    %94 = vector.load %arg5[%c0_66, %c8] : memref<8x25xf32, #tpu.memory_space<vmem>>, vector<8x1xf32>
    tpu.vector_store %arg5[%c0_66, %c8], %93 {strides = array<i32>} : memref<8x25xf32, #tpu.memory_space<vmem>>, vector<8x1xf32>,
    %c0_67 = arith.constant 0 : index
    %c16 = arith.constant 16 : index
    %95 = vector.load %arg5[%c0_67, %c16] : memref<8x25xf32, #tpu.memory_space<vmem>>, vector<8x1xf32>
    tpu.vector_store %arg5[%c0_67, %c16], %93 {strides = array<i32>} : memref<8x25xf32, #tpu.memory_space<vmem>>, vector<8x1xf32>,
    %c4_68 = arith.constant 4 : index
    %c0_69 = arith.constant 0 : index
    %c0_70 = arith.constant 0 : index
    %96 = vector.load %arg3[%c4_68, %c0_69, %c0_70] : memref<5x8x768xf32, #tpu.memory_space<vmem>>, vector<1x8x768xf32>
    %97 = vector.shape_cast %96 : vector<1x8x768xf32> to vector<8x768xf32>
    %98 = arith.mulf %71, %97 : vector<8x768xf32>
    %cst_71 = arith.constant dense<0.000000e+00> : vector<8xf32>
    %99 = vector.multi_reduction <add>, %98, %cst_71 [1] : vector<8x768xf32> to vector<8xf32>
    %100 = vector.shape_cast %99 : vector<8xf32> to vector<8x1xf32>
    %cst_72 = arith.constant 0.000000e+00 : f32
    %101 = vector.broadcast %cst_72 : f32 to vector<8x1xf32>
    %102 = arith.subf %101, %100 : vector<8x1xf32>
    %c0_73 = arith.constant 0 : index
    %c9 = arith.constant 9 : index
    %103 = vector.load %arg5[%c0_73, %c9] : memref<8x25xf32, #tpu.memory_space<vmem>>, vector<8x1xf32>
    tpu.vector_store %arg5[%c0_73, %c9], %102 {strides = array<i32>} : memref<8x25xf32, #tpu.memory_space<vmem>>, vector<8x1xf32>,
    %c0_74 = arith.constant 0 : index
    %c21 = arith.constant 21 : index
    %104 = vector.load %arg5[%c0_74, %c21] : memref<8x25xf32, #tpu.memory_space<vmem>>, vector<8x1xf32>
    tpu.vector_store %arg5[%c0_74, %c21], %102 {strides = array<i32>} : memref<8x25xf32, #tpu.memory_space<vmem>>, vector<8x1xf32>,
    %c2_75 = arith.constant 2 : index
    %c0_76 = arith.constant 0 : index
    %c0_77 = arith.constant 0 : index
    %105 = vector.load %arg3[%c2_75, %c0_76, %c0_77] : memref<5x8x768xf32, #tpu.memory_space<vmem>>, vector<1x8x768xf32>
    %106 = vector.shape_cast %105 : vector<1x8x768xf32> to vector<8x768xf32>
    %107 = arith.mulf %12, %106 : vector<8x768xf32>
    %cst_78 = arith.constant dense<0.000000e+00> : vector<8xf32>
    %108 = vector.multi_reduction <add>, %107, %cst_78 [1] : vector<8x768xf32> to vector<8xf32>
    %109 = vector.shape_cast %108 : vector<8xf32> to vector<8x1xf32>
    %c0_79 = arith.constant 0 : index
    %c2_80 = arith.constant 2 : index
    %110 = vector.load %arg4[%c0_79, %c2_80] : memref<8x5xf32, #tpu.memory_space<vmem>>, vector<8x1xf32>
    tpu.vector_store %arg4[%c0_79, %c2_80], %109 {strides = array<i32>} : memref<8x5xf32, #tpu.memory_space<vmem>>, vector<8x1xf32>,
    %111 = arith.mulf %15, %106 : vector<8x768xf32>
    %112 = arith.mulf %111, %106 : vector<8x768xf32>
    %cst_81 = arith.constant dense<0.000000e+00> : vector<8xf32>
    %113 = vector.multi_reduction <add>, %112, %cst_81 [1] : vector<8x768xf32> to vector<8xf32>
    %114 = vector.shape_cast %113 : vector<8xf32> to vector<8x1xf32>
    %cst_82 = arith.constant 0.000000e+00 : f32
    %115 = vector.broadcast %cst_82 : f32 to vector<8x1xf32>
    %116 = arith.subf %115, %114 : vector<8x1xf32>
    %c0_83 = arith.constant 0 : index
    %c12 = arith.constant 12 : index
    %117 = vector.load %arg5[%c0_83, %c12] : memref<8x25xf32, #tpu.memory_space<vmem>>, vector<8x1xf32>
    tpu.vector_store %arg5[%c0_83, %c12], %116 {strides = array<i32>} : memref<8x25xf32, #tpu.memory_space<vmem>>, vector<8x1xf32>,
    %c3_84 = arith.constant 3 : index
    %c0_85 = arith.constant 0 : index
    %c0_86 = arith.constant 0 : index
    %118 = vector.load %arg3[%c3_84, %c0_85, %c0_86] : memref<5x8x768xf32, #tpu.memory_space<vmem>>, vector<1x8x768xf32>
    %119 = vector.shape_cast %118 : vector<1x8x768xf32> to vector<8x768xf32>
    %120 = arith.mulf %111, %119 : vector<8x768xf32>
    %cst_87 = arith.constant dense<0.000000e+00> : vector<8xf32>
    %121 = vector.multi_reduction <add>, %120, %cst_87 [1] : vector<8x768xf32> to vector<8xf32>
    %122 = vector.shape_cast %121 : vector<8xf32> to vector<8x1xf32>
    %cst_88 = arith.constant 0.000000e+00 : f32
    %123 = vector.broadcast %cst_88 : f32 to vector<8x1xf32>
    %124 = arith.subf %123, %122 : vector<8x1xf32>
    %c0_89 = arith.constant 0 : index
    %c13 = arith.constant 13 : index
    %125 = vector.load %arg5[%c0_89, %c13] : memref<8x25xf32, #tpu.memory_space<vmem>>, vector<8x1xf32>
    tpu.vector_store %arg5[%c0_89, %c13], %124 {strides = array<i32>} : memref<8x25xf32, #tpu.memory_space<vmem>>, vector<8x1xf32>,
    %c0_90 = arith.constant 0 : index
    %c17 = arith.constant 17 : index
    %126 = vector.load %arg5[%c0_90, %c17] : memref<8x25xf32, #tpu.memory_space<vmem>>, vector<8x1xf32>
    tpu.vector_store %arg5[%c0_90, %c17], %124 {strides = array<i32>} : memref<8x25xf32, #tpu.memory_space<vmem>>, vector<8x1xf32>,
    %c4_91 = arith.constant 4 : index
    %c0_92 = arith.constant 0 : index
    %c0_93 = arith.constant 0 : index
    %127 = vector.load %arg3[%c4_91, %c0_92, %c0_93] : memref<5x8x768xf32, #tpu.memory_space<vmem>>, vector<1x8x768xf32>
    %128 = vector.shape_cast %127 : vector<1x8x768xf32> to vector<8x768xf32>
    %129 = arith.mulf %111, %128 : vector<8x768xf32>
    %cst_94 = arith.constant dense<0.000000e+00> : vector<8xf32>
    %130 = vector.multi_reduction <add>, %129, %cst_94 [1] : vector<8x768xf32> to vector<8xf32>
    %131 = vector.shape_cast %130 : vector<8xf32> to vector<8x1xf32>
    %cst_95 = arith.constant 0.000000e+00 : f32
    %132 = vector.broadcast %cst_95 : f32 to vector<8x1xf32>
    %133 = arith.subf %132, %131 : vector<8x1xf32>
    %c0_96 = arith.constant 0 : index
    %c14 = arith.constant 14 : index
    %134 = vector.load %arg5[%c0_96, %c14] : memref<8x25xf32, #tpu.memory_space<vmem>>, vector<8x1xf32>
    tpu.vector_store %arg5[%c0_96, %c14], %133 {strides = array<i32>} : memref<8x25xf32, #tpu.memory_space<vmem>>, vector<8x1xf32>,
    %c0_97 = arith.constant 0 : index
    %c22 = arith.constant 22 : index
    %135 = vector.load %arg5[%c0_97, %c22] : memref<8x25xf32, #tpu.memory_space<vmem>>, vector<8x1xf32>
    tpu.vector_store %arg5[%c0_97, %c22], %133 {strides = array<i32>} : memref<8x25xf32, #tpu.memory_space<vmem>>, vector<8x1xf32>,
    %c3_98 = arith.constant 3 : index
    %c0_99 = arith.constant 0 : index
    %c0_100 = arith.constant 0 : index
    %136 = vector.load %arg3[%c3_98, %c0_99, %c0_100] : memref<5x8x768xf32, #tpu.memory_space<vmem>>, vector<1x8x768xf32>
    %137 = vector.shape_cast %136 : vector<1x8x768xf32> to vector<8x768xf32>
    %138 = arith.mulf %12, %137 : vector<8x768xf32>
    %cst_101 = arith.constant dense<0.000000e+00> : vector<8xf32>
    %139 = vector.multi_reduction <add>, %138, %cst_101 [1] : vector<8x768xf32> to vector<8xf32>
    %140 = vector.shape_cast %139 : vector<8xf32> to vector<8x1xf32>
    %c0_102 = arith.constant 0 : index
    %c3_103 = arith.constant 3 : index
    %141 = vector.load %arg4[%c0_102, %c3_103] : memref<8x5xf32, #tpu.memory_space<vmem>>, vector<8x1xf32>
    tpu.vector_store %arg4[%c0_102, %c3_103], %140 {strides = array<i32>} : memref<8x5xf32, #tpu.memory_space<vmem>>, vector<8x1xf32>,
    %142 = arith.mulf %15, %137 : vector<8x768xf32>
    %143 = arith.mulf %142, %137 : vector<8x768xf32>
    %cst_104 = arith.constant dense<0.000000e+00> : vector<8xf32>
    %144 = vector.multi_reduction <add>, %143, %cst_104 [1] : vector<8x768xf32> to vector<8xf32>
    %145 = vector.shape_cast %144 : vector<8xf32> to vector<8x1xf32>
    %cst_105 = arith.constant 0.000000e+00 : f32
    %146 = vector.broadcast %cst_105 : f32 to vector<8x1xf32>
    %147 = arith.subf %146, %145 : vector<8x1xf32>
    %c0_106 = arith.constant 0 : index
    %c18 = arith.constant 18 : index
    %148 = vector.load %arg5[%c0_106, %c18] : memref<8x25xf32, #tpu.memory_space<vmem>>, vector<8x1xf32>
    tpu.vector_store %arg5[%c0_106, %c18], %147 {strides = array<i32>} : memref<8x25xf32, #tpu.memory_space<vmem>>, vector<8x1xf32>,
    %c4_107 = arith.constant 4 : index
    %c0_108 = arith.constant 0 : index
    %c0_109 = arith.constant 0 : index
    %149 = vector.load %arg3[%c4_107, %c0_108, %c0_109] : memref<5x8x768xf32, #tpu.memory_space<vmem>>, vector<1x8x768xf32>
    %150 = vector.shape_cast %149 : vector<1x8x768xf32> to vector<8x768xf32>
    %151 = arith.mulf %142, %150 : vector<8x768xf32>
    %cst_110 = arith.constant dense<0.000000e+00> : vector<8xf32>
    %152 = vector.multi_reduction <add>, %151, %cst_110 [1] : vector<8x768xf32> to vector<8xf32>
    %153 = vector.shape_cast %152 : vector<8xf32> to vector<8x1xf32>
    %cst_111 = arith.constant 0.000000e+00 : f32
    %154 = vector.broadcast %cst_111 : f32 to vector<8x1xf32>
    %155 = arith.subf %154, %153 : vector<8x1xf32>
    %c0_112 = arith.constant 0 : index
    %c19 = arith.constant 19 : index
    %156 = vector.load %arg5[%c0_112, %c19] : memref<8x25xf32, #tpu.memory_space<vmem>>, vector<8x1xf32>
    tpu.vector_store %arg5[%c0_112, %c19], %155 {strides = array<i32>} : memref<8x25xf32, #tpu.memory_space<vmem>>, vector<8x1xf32>,
    %c0_113 = arith.constant 0 : index
    %c23 = arith.constant 23 : index
    %157 = vector.load %arg5[%c0_113, %c23] : memref<8x25xf32, #tpu.memory_space<vmem>>, vector<8x1xf32>
    tpu.vector_store %arg5[%c0_113, %c23], %155 {strides = array<i32>} : memref<8x25xf32, #tpu.memory_space<vmem>>, vector<8x1xf32>,
    %c4_114 = arith.constant 4 : index
    %c0_115 = arith.constant 0 : index
    %c0_116 = arith.constant 0 : index
    %158 = vector.load %arg3[%c4_114, %c0_115, %c0_116] : memref<5x8x768xf32, #tpu.memory_space<vmem>>, vector<1x8x768xf32>
    %159 = vector.shape_cast %158 : vector<1x8x768xf32> to vector<8x768xf32>
    %160 = arith.mulf %12, %159 : vector<8x768xf32>
    %cst_117 = arith.constant dense<0.000000e+00> : vector<8xf32>
    %161 = vector.multi_reduction <add>, %160, %cst_117 [1] : vector<8x768xf32> to vector<8xf32>
    %162 = vector.shape_cast %161 : vector<8xf32> to vector<8x1xf32>
    %c0_118 = arith.constant 0 : index
    %c4_119 = arith.constant 4 : index
    %163 = vector.load %arg4[%c0_118, %c4_119] : memref<8x5xf32, #tpu.memory_space<vmem>>, vector<8x1xf32>
    tpu.vector_store %arg4[%c0_118, %c4_119], %162 {strides = array<i32>} : memref<8x5xf32, #tpu.memory_space<vmem>>, vector<8x1xf32>,
    %164 = arith.mulf %15, %159 : vector<8x768xf32>
    %165 = arith.mulf %164, %159 : vector<8x768xf32>
    %cst_120 = arith.constant dense<0.000000e+00> : vector<8xf32>
    %166 = vector.multi_reduction <add>, %165, %cst_120 [1] : vector<8x768xf32> to vector<8xf32>
    %167 = vector.shape_cast %166 : vector<8xf32> to vector<8x1xf32>
    %cst_121 = arith.constant 0.000000e+00 : f32
    %168 = vector.broadcast %cst_121 : f32 to vector<8x1xf32>
    %169 = arith.subf %168, %167 : vector<8x1xf32>
    %c0_122 = arith.constant 0 : index
    %c24 = arith.constant 24 : index
    %170 = vector.load %arg5[%c0_122, %c24] : memref<8x25xf32, #tpu.memory_space<vmem>>, vector<8x1xf32>
    tpu.vector_store %arg5[%c0_122, %c24], %169 {strides = array<i32>} : memref<8x25xf32, #tpu.memory_space<vmem>>, vector<8x1xf32>,
    return
  }
  func.func @transform_0(%arg0: i32) -> (i32, i32) {
    %c0_i32 = arith.constant 0 : i32
    %c0_i32_0 = arith.constant 0 : i32
    return %arg0, %c0_i32 : i32, i32
  }
  func.func @transform_1(%arg0: i32) -> (i32, i32) {
    %c0_i32 = arith.constant 0 : i32
    %c0_i32_0 = arith.constant 0 : i32
    return %arg0, %c0_i32 : i32, i32
  }
  func.func @transform_2(%arg0: i32) -> (i32, i32, i32) {
    %c0_i32 = arith.constant 0 : i32
    %c0_i32_0 = arith.constant 0 : i32
    %c0_i32_1 = arith.constant 0 : i32
    return %c0_i32, %arg0, %c0_i32_0 : i32, i32, i32
  }
  func.func @transform_3(%arg0: i32) -> (i32, i32) {
    %c0_i32 = arith.constant 0 : i32
    %c0_i32_0 = arith.constant 0 : i32
    return %arg0, %c0_i32 : i32, i32
  }
  func.func @transform_4(%arg0: i32) -> (i32, i32) {
    %c0_i32 = arith.constant 0 : i32
    %c0_i32_0 = arith.constant 0 : i32
    return %arg0, %c0_i32 : i32, i32
  }
}

</mosaic_0001>

<llo_original>
// kernel: custom-call.59
$region0: #{custom-call.59}
  %s0 = inlined_call_operand.vmem [shape: f32[4,5,5], index: 0, kind: input, shape index: {}]
  %s1 = inlined_call_operand.vmem [shape: f32[4,5,5], index: 1, kind: output, shape index: {0}]
  %s2 = inlined_call_operand.hbm [shape: s32[4,5], index: 2, kind: output, shape index: {1}]
  %s3 = inlined_call_operand.vmem [shape: s32[4,5], index: 3, kind: output, shape index: {2}]
  %4 = xla_tuple %s1, %s2, %s3
  $region1: #{custom-call.59} parent=0
    #allocation0 [shape = 'u8[8192]{0}', space=vmem, size = 0x2000, scoped, tag = 'operand span for operand 0']
    #allocation1 [shape = 'u8[8192]{0}', space=vmem, size = 0x2000, scoped, tag = 'operand span for operand 1']
    #allocation2 [shape = 'u8[4096]{0}', space=vmem, size = 0x1000, scoped, tag = 'operand span for operand 2']
    #allocation3 [shape = 'u8[4096]{0}', space=vmem, size = 0x1000, scoped, tag = 'packed  for operand 2']
    #allocation4 [shape = 's32[2]{0}', space=sflag, size = 0x8, scoped, tag = 'scoped memory for custom-call.59']
    #allocation5 [shape = 'u8[4096]{0}', space=vmem, size = 0x1000, scoped, tag = 'operand span for operand 3']
    #allocation6 [shape = 'u8[4096]{0}', space=vmem, size = 0x1000, scoped, tag = 'packed  for operand 3']
    %5 = vsyncpa [#allocation4], 0
    %s6 = scalar_lea.sflag [#allocation4], 1
    %7 = vsyncpa %s6, 0
    loop: start=0, step=1, limit=6
    $region2: #{custom-call.59} parent=1 // loop_pre_header
      _
    $region3: #{custom-call.59} parent=1 // loop_header
      %s9 = sphi 0, %s13
      %p10 = scmp.ge.s32.totalorder %s9, 6
      %s21 = sphi 0, %s23
      %s24 = sphi 0, %s21
      %s25 = sphi 0, %s24
      %s41 = sphi 0, %s25
      %s49 = sphi 0, %s51
      %s52 = sphi 0, %s49
      %s53 = sphi 0, %s52
      %s69 = sphi 0, %s53
    $region4: #{custom-call.59} parent=1 // loop_header_branch
      %12 = sbr.rel (%p10) target = $region8
    $region5: #{custom-call.59} parent=1 // loop_body
      %s14 = ssub.s32 %s9, 1
      %s15 = ssub.s32 %s9, 2
      %s16 = sadd.s32 %s9, 1
      %s17 = sshrl.u32 %s9, 3
      %s18 = sshrl.u32 %s16, 3
      %s19 = ssub.s32 %s17, %s18
      %p20 = scmp.eq.s32.totalorder %s19, 0
      %s22 = sadd.s32 %s21, 1
      %s23 = scalar_select %p20, %s21, %s22
      %p26 = pneg %p20
      %p27 = scmp.eq.s32.totalorder %s9, 3
      %p28 = por %p26, %p27
      %p29 = scmp.ne.s32.totalorder %s21, %s24
      %p30 = scmp.eq.s32.totalorder %s9, 0
      %p31 = por %p29, %p30
      %p32 = scmp.ne.s32.totalorder %s21, %s24
      %p33 = scmp.eq.s32.totalorder %s14, 3
      %p34 = por %p32, %p33
      %p35 = scmp.ne.s32.totalorder %s24, %s25
      %p36 = scmp.eq.s32.totalorder %s14, 0
      %p37 = por %p35, %p36
      %p38 = scmp.ne.s32.totalorder %s24, %s25
      %p39 = scmp.eq.s32.totalorder %s15, 3
      %p40 = por %p38, %p39
      %p42 = scmp.ne.s32.totalorder %s25, %s41
      %p43 = scmp.eq.s32.totalorder %s15, 0
      %p44 = por %p42, %p43
      %s45 = sshrl.u32 %s9, 3
      %s46 = sshrl.u32 %s16, 3
      %s47 = ssub.s32 %s45, %s46
      %p48 = scmp.eq.s32.totalorder %s47, 0
      %s50 = sadd.s32 %s49, 1
      %s51 = scalar_select %p48, %s49, %s50
      %p54 = pneg %p48
      %p55 = scmp.eq.s32.totalorder %s9, 3
      %p56 = por %p54, %p55
      %p57 = scmp.ne.s32.totalorder %s49, %s52
      %p58 = scmp.eq.s32.totalorder %s9, 0
      %p59 = por %p57, %p58
      %p60 = scmp.ne.s32.totalorder %s49, %s52
      %p61 = scmp.eq.s32.totalorder %s14, 3
      %p62 = por %p60, %p61
      %p63 = scmp.ne.s32.totalorder %s52, %s53
      %p64 = scmp.eq.s32.totalorder %s14, 0
      %p65 = por %p63, %p64
      %p66 = scmp.ne.s32.totalorder %s52, %s53
      %p67 = scmp.eq.s32.totalorder %s15, 3
      %p68 = por %p66, %p67
      %p70 = scmp.ne.s32.totalorder %s53, %s69
      %p71 = scmp.eq.s32.totalorder %s15, 0
      %p72 = por %p70, %p71
      %p73 = scmp.le.s32.totalorder 1, %s9
      %p74 = scmp.lt.s32.totalorder %s9, 5
      %p75 = pnand %p73, %p74
      %p76 = pneg %p75
      // Predicated region
      $region9: #{custom-call.59} parent=5 // pred_check
        _
      $region10: #{custom-call.59} parent=5 // pred_check_branch
        %78 = sbr.rel (%p75) target = $region12
      $region11: #{custom-call.59} parent=5 // pred_region
        %s79 = ssub.s32 %s9, 1
      $region12: #{custom-call.59} parent=5 // pred_fallthru
        _
      %p80 = scmp.lt.s32.totalorder %s9, 4
      // Predicated region
      $region13: #{custom-call.59} parent=5 // pred_check
        %p81 = pneg %p80
      $region14: #{custom-call.59} parent=5 // pred_check_branch
        %83 = sbr.rel (%p81) target = $region16
      $region15: #{custom-call.59} parent=5 // pred_region
        %s84 = sand.u32 %s9, 1
        %s85 = sand.u32 %s9, 1
        %s86 = smul.addr %s85, 8
        %s87 = scalar_lea.vmem [#allocation0], %s86
        %s88 = smul.addr %s9, 8
        %s89 = scalar_lea.vmem %s0, %s88
        // Predicated region
        $region17: #{custom-call.59} parent=15 // pred_check
          _
        $region18: #{custom-call.59} parent=15 // pred_check_branch
          %91 = sbr.rel (0) target = $region20
        $region19: #{custom-call.59} parent=15 // pred_region
          // Predicated region
          $region21: #{custom-call.59} parent=19 // pred_check
            _
          $region22: #{custom-call.59} parent=19 // pred_check_branch
            %93 = sbr.rel (0) target = $region24
          $region23: #{custom-call.59} parent=19 // pred_region
            // Predicated region
            $region36: #{custom-call.59} parent=23 // pred_check
              _
            $region37: #{custom-call.59} parent=23 // pred_check_branch
              %109 = sbr.rel (0) target = $region39
            $region38: #{custom-call.59} parent=23 // pred_region
              loop: start=0, step=1, limit=1
              $region40: #{custom-call.59} parent=38 // loop_pre_header
                _
              $region41: #{custom-call.59} parent=38 // loop_header
                %s111 = sphi 0, %s115
                %p112 = scmp.ge.s32.totalorder %s111, 1
                %s116 = sphi %s89, %s89
                %s117 = sphi %s87, %s87
              $region42: #{custom-call.59} parent=38 // loop_header_branch
                %114 = sbr.rel (%p112) target = $region46
              $region43: #{custom-call.59} parent=38 // loop_body
                %v118 = vld [vmem:[%s116] sm:$0xff]
                %119 = vst [vmem:[%s117] sm:$0xff] %v118
              $region44: #{custom-call.59} parent=38 // loop_footer
                %s115 = sadd.s32 1, %s111
              $region45: #{custom-call.59} parent=38 // loop_footer_branch
                %110 = sbr.rel target = $region41
              $region46: #{custom-call.59} parent=38 // loop_exit
                _
            $region39: #{custom-call.59} parent=23 // pred_fallthru
              _
            // Predicated region
            $region47: #{custom-call.59} parent=23 // pred_check
              _
            $region48: #{custom-call.59} parent=23 // pred_check_branch
              %121 = sbr.rel target = $region50
            $region49: #{custom-call.59} parent=23 // pred_region
              _
            $region50: #{custom-call.59} parent=23 // pred_fallthru
              _
          $region24: #{custom-call.59} parent=19 // pred_fallthru
            _
          // Predicated region
          $region25: #{custom-call.59} parent=19 // pred_check
            _
          $region26: #{custom-call.59} parent=19 // pred_check_branch
            %95 = sbr.rel target = $region28
          $region27: #{custom-call.59} parent=19 // pred_region
            %s97 = ssub.s32 256, 1
            loop: start=0, step=1, limit=1
            $region29: #{custom-call.59} parent=27 // loop_pre_header
              _
            $region30: #{custom-call.59} parent=27 // loop_header
              %s99 = sphi 0, %s103
              %p100 = scmp.ge.s32.totalorder %s99, 1
              %s104 = sphi %s89, %s89
              %s105 = sphi %s87, %s87
            $region31: #{custom-call.59} parent=27 // loop_header_branch
              %102 = sbr.rel (%p100) target = $region35
            $region32: #{custom-call.59} parent=27 // loop_body
              %v106 = vld [vmem:[%s104] sm:%s97]
              %107 = vst [vmem:[%s105] sm:%s97] %v106
            $region33: #{custom-call.59} parent=27 // loop_footer
              %s103 = sadd.s32 1, %s99
            $region34: #{custom-call.59} parent=27 // loop_footer_branch
              %98 = sbr.rel target = $region30
            $region35: #{custom-call.59} parent=27 // loop_exit
              _
          $region28: #{custom-call.59} parent=19 // pred_fallthru
            _
        $region20: #{custom-call.59} parent=15 // pred_fallthru
          _
        %122 = vnop
      $region16: #{custom-call.59} parent=5 // pred_fallthru
        _
      %p123 = scmp.le.s32.totalorder 1, %s9
      %p124 = scmp.lt.s32.totalorder %s9, 5
      %p125 = pnand %p123, %p124
      %p126 = pneg %p125
      // Predicated region
      $region51: #{custom-call.59} parent=5 // pred_check
        _
      $region52: #{custom-call.59} parent=5 // pred_check_branch
        %128 = sbr.rel (%p125) target = $region54
      $region53: #{custom-call.59} parent=5 // pred_region
        #allocation7 [shape = 's32[5,128]{1,0}', space=vmem, size = 0x1000, scoped, tag = 'scratch for permutations']
        %s129 = ssub.s32 %s9, 1
        %s130 = sand.u32 %s14, 1
        %s131 = sand.u32 %s14, 1
        %s132 = smul.addr %s131, 8
        %s133 = scalar_lea.vmem [#allocation0], %s132
        %s134 = sand.u32 %s14, 1
        %s135 = sand.u32 %s14, 1
        %s136 = smul.addr %s135, 8
        %s137 = scalar_lea.vmem [#allocation0], %s136
        %s138 = sand.u32 %s14, 1
        %s139 = sand.u32 %s14, 1
        %s140 = smul.addr %s139, 8
        %s141 = scalar_lea.vmem [#allocation1], %s140
        %p142 = pneg %p37
        %p143 = pneg %p34
        %s144 = sand.u32 %s24, 1
        %s145 = scalar_lea.sflag [#allocation4], %s144
        %s146 = sand.u32 %s24, 1
        %s147 = smul.addr %s146, 4
        %s148 = scalar_lea.vmem [#allocation3], %s147
        %p149 = pneg %p65
        %p150 = pneg %p62
        %s151 = sand.u32 %s52, 1
        %s152 = sand.u32 %s52, 1
        %s153 = smul.addr %s152, 4
        %s154 = scalar_lea.vmem [#allocation6], %s153
        %s155 = sshrl.u32 %s14, 3
        %s156 = sshrl.u32 %s14, 3
        %v157 = vld [vmem:[%s133] sm:$0xff]
        %158 = vst [vmem:[%s141] sm:$0xff] %v157
        %s159 = sand.u32 %s14, 7
        %s160 = scalar_lea.vmem [#allocation2], %s159
        %s161 = sand.u32 %s14, 7
        %s162 = scalar_lea.vmem [#allocation5], %s161
        %163 = vst [vmem:[%s160] sm:$0x1] 0
        %v164 = vlaneseq
        %v165 = vshrl.u32 %v164, 7
        %v166 = vmov %v165
        %168 = vst [vmem:[#allocation7] sm:$0xff] %v166
        loop: start=0, step=1, limit=5
        $region56: #{custom-call.59} parent=53 // loop_pre_header
          _
        $region57: #{custom-call.59} parent=53 // loop_header
          %s170 = sphi 0, %s174
          %p171 = scmp.ge.s32.totalorder %s170, 5
        $region58: #{custom-call.59} parent=53 // loop_header_branch
          %173 = sbr.rel (%p171) target = $region62
        $region59: #{custom-call.59} parent=53 // loop_body
          %v175 = vstv %s170
          %v176 = vlaneseq
          %v177 = vshrl.u32 %v176, 7
          %v178 = vmov %v177
          %v179 = vld [vmem:[%s141] sm:$0xff]
          %v180 = vand.u32 2147483647, %v179
          %v182 = vstv %s170
          %vm183 = vcmp.ge.s32.totalorder %v178, %v182
          %vm184 = vcmp.lt.s32.totalorder %v178, 5
          %vm185 = vmand %vm183, %vm184
          %vm186 = vcmp.lt.f32.partialorder -inf, %v180
          %vm187 = vmand %vm185, %vm186
          %v188 = vsel %vm187, %v178, %v175
          %v189 = vsel %vm187, %v180, -inf
          %v190 = vrot.slane %v189, 1
          %v191 = vrot.slane %v188, 1
          %vm192 = vcmp.ge.f32.partialorder %v190, %v189
          %v193 = vsel %vm192, %v190, %v189
          %v194 = vsel %vm192, %v191, %v188
          %v195 = vrot.slane %v190, 1
          %v196 = vrot.slane %v191, 1
          %vm197 = vcmp.ge.f32.partialorder %v195, %v193
          %v198 = vsel %vm197, %v195, %v193
          %v199 = vsel %vm197, %v196, %v194
          %v200 = vrot.slane %v195, 1
          %v201 = vrot.slane %v196, 1
          %vm202 = vcmp.ge.f32.partialorder %v200, %v198
          %v203 = vsel %vm202, %v200, %v198
          %v204 = vsel %vm202, %v201, %v199
          %v205 = vrot.slane %v200, 1
          %v206 = vrot.slane %v201, 1
          %vm207 = vcmp.ge.f32.partialorder %v205, %v203
          %v208 = vsel %vm207, %v205, %v203
          %v209 = vsel %vm207, %v206, %v204
          %v210 = vrot.slane %v205, 1
          %v211 = vrot.slane %v206, 1
          %vm212 = vcmp.ge.f32.partialorder %v210, %v208
          %v213 = vsel %vm212, %v210, %v208
          %v214 = vsel %vm212, %v211, %v209
          %v215 = vrot.slane %v210, 1
          %v216 = vrot.slane %v211, 1
          %vm217 = vcmp.ge.f32.partialorder %v215, %v213
          %v218 = vsel %vm217, %v215, %v213
          %v219 = vsel %vm217, %v216, %v214
          %v220 = vrot.slane %v215, 1
          %v221 = vrot.slane %v216, 1
          %vm222 = vcmp.ge.f32.partialorder %v220, %v218
          %v223 = vsel %vm222, %v220, %v218
          %v224 = vsel %vm222, %v221, %v219
          %s225 = ssub.s32 128, %s170
          %226 = vrot.lane.b32.xlu0 %v224, %s225
          %v227 = vpop.permute.xlu0 %226
          %s228 = vtos %v227
          %v229 = vstv %s170
          %v230 = vlaneseq
          %v231 = vand.u32 %v230, 127
          %vm232 = vcmp.eq.s32.totalorder %v231, %v229
          %v233 = vstv %s228
          %v234 = vld [vmem:[%s160] ss:$0 sm:$0xff]
          %v235 = vsel %vm232, %v233, %v234
          %236 = vst [vmem:[%s160] sm:$0x1] %v235
          %s237 = scalar_lea.vmem %s141, %s170 [#allocation1]
          %s238 = scalar_lea.vmem %s141, %s228 [#allocation1]
          %v239 = vld [vmem:[%s237] ss:$0 sm:$0xff]
          %v240 = vld [vmem:[%s238] ss:$0 sm:$0xff]
          %241 = vst [vmem:[%s238] sm:$0x1] %v239
          %242 = vst [vmem:[%s237] sm:$0x1] %v240
          %s243 = scalar_lea.vmem [#allocation7], %s170
          %s244 = scalar_lea.vmem [#allocation7], %s228
          %v245 = vld [vmem:[%s243] ss:$0 sm:$0xff]
          %v246 = vld [vmem:[%s244] ss:$0 sm:$0xff]
          %247 = vst [vmem:[%s244] sm:$0x1] %v245
          %248 = vst [vmem:[%s243] sm:$0x1] %v246
          %vm249 = vcmp.ne.f32.partialorder %v240, 0.0
          %vm250 = vmand %vm232, %vm249
          %v251 = vsel %vm250, %v240, 1.0
          %v252 = vlaneseq
          %v253 = vand.u32 %v252, 127
          %v254 = vstv %s170
          %vm255 = vcmp.gt.s32.totalorder %v253, %v254
          %v256 = vsel %vm255, %v240, 0.0
          %v257 = vlaneseq
          %v258 = vshrl.u32 %v257, 7
          %v259 = vmov %v258
          %v260 = vld [vmem:[%s141] sm:$0xff]
          %v262 = vstv %s170
          %vm263 = vcmp.gt.s32.totalorder %v259, %v262
          %v264 = vsel %vm263, %v251, 1.0
          %v265 = vrcp.pop %v264
          %v266 = vmul.f32 %v260, %v265
          %vm267 = vmand %vm263, %vm232
          %v268 = vsel %vm267, %v266, 0.0
          %269 = vadd.xlane.f32.xlu0 %v268
          %v270 = vpop.xlane.xlu0 %269
          %v271 = vmul.f32 %v270, %v256
          %v272 = vsub.f32 %v266, %v271
          %273 = vst [vmem:[%s141] sm:$0xff] %v272
        $region60: #{custom-call.59} parent=53 // loop_footer
          %s174 = sadd.s32 1, %s170
        $region61: #{custom-call.59} parent=53 // loop_footer_branch
          %169 = sbr.rel target = $region57
        $region62: #{custom-call.59} parent=53 // loop_exit
          _
        %v274 = vld [vmem:[#allocation7] sm:$0xff]
        %s275 = scalar_lea.vmem [#allocation7], 8
        %s276 = scalar_lea.vmem [#allocation7], 16
        %s277 = scalar_lea.vmem [#allocation7], 24
        %s278 = scalar_lea.vmem [#allocation7], 32
        %s279 = scalar_lea.vmem [#allocation7], 40
        %s280 = scalar_lea.vmem [#allocation7], 48
        %s281 = scalar_lea.vmem [#allocation7], 56
        %s282 = scalar_lea.vmem [#allocation7], 64
        %s283 = scalar_lea.vmem [#allocation7], 72
        %s284 = scalar_lea.vmem [#allocation7], 80
        %s285 = scalar_lea.vmem [#allocation7], 88
        %s286 = scalar_lea.vmem [#allocation7], 96
        %s287 = scalar_lea.vmem [#allocation7], 104
        %s288 = scalar_lea.vmem [#allocation7], 112
        %s289 = scalar_lea.vmem [#allocation7], 120
        %290 = vxpose.xlu0.b32.start [1/16] %v274, 128
        %291 = vxpose.xlu0.b32.cont [2/16] 0, 128
        %292 = vxpose.xlu0.b32.cont [3/16] 0, 128
        %293 = vxpose.xlu0.b32.cont [4/16] 0, 128
        %294 = vxpose.xlu0.b32.cont [5/16] 0, 128
        %295 = vxpose.xlu0.b32.cont [6/16] 0, 128
        %296 = vxpose.xlu0.b32.cont [7/16] 0, 128
        %297 = vxpose.xlu0.b32.cont [8/16] 0, 128
        %298 = vxpose.xlu0.b32.cont [9/16] 0, 128
        %299 = vxpose.xlu0.b32.cont [10/16] 0, 128
        %300 = vxpose.xlu0.b32.cont [11/16] 0, 128
        %301 = vxpose.xlu0.b32.cont [12/16] 0, 128
        %302 = vxpose.xlu0.b32.cont [13/16] 0, 128
        %303 = vxpose.xlu0.b32.cont [14/16] 0, 128
        %304 = vxpose.xlu0.b32.cont [15/16] 0, 128
        %305 = vxpose.xlu0.b32.end [16/16] 0, 128
        %v306 = vpop.trf.xlu0
        %v307 = vpop.trf.xlu0
        %v308 = vpop.trf.xlu0
        %v309 = vpop.trf.xlu0
        %v310 = vpop.trf.xlu0
        %v311 = vpop.trf.xlu0
        %v312 = vpop.trf.xlu0
        %v313 = vpop.trf.xlu0
        %v314 = vpop.trf.xlu0
        %v315 = vpop.trf.xlu0
        %v316 = vpop.trf.xlu0
        %v317 = vpop.trf.xlu0
        %v318 = vpop.trf.xlu0
        %v319 = vpop.trf.xlu0
        %v320 = vpop.trf.xlu0
        %v321 = vpop.trf.xlu0
        %322 = vst [vmem:[%s162] sm:$0x1] %v306
        %s324 = sshll.u32 1, 4
        %s325 = ssub.s32 %s324, 1
        %v327 = vld [vmem:[#allocation2] sm:%s325]
        %s328 = sshll.u32 1, 4
        %s329 = ssub.s32 %s328, 1
        %330 = vst [vmem:[%s148] sm:%s329] %v327
        %s332 = sshll.u32 1, 4
        %s333 = ssub.s32 %s332, 1
        %v335 = vld [vmem:[#allocation5] sm:%s333]
        %s336 = sshll.u32 1, 4
        %s337 = ssub.s32 %s336, 1
        %338 = vst [vmem:[%s154] sm:%s337] %v335
        %s339 = sand.u32 %s14, 1
        %s340 = sand.u32 %s14, 1
        %s341 = smul.addr %s340, 8
        %s342 = scalar_lea.vmem [#allocation1], %s341
        %s343 = sand.u32 %s24, 1
        %s344 = scalar_lea.sflag [#allocation4], %s343
        %s345 = sand.u32 %s24, 1
        %s346 = smul.addr %s345, 4
        %s347 = scalar_lea.vmem [#allocation3], %s346
        %s348 = sand.u32 %s52, 1
        %s349 = sand.u32 %s52, 1
        %s350 = smul.addr %s349, 4
        %s351 = scalar_lea.vmem [#allocation6], %s350
        %s352 = smul.addr %s14, 8
        %s353 = scalar_lea.vmem %s1, %s352
        // Predicated region
        $region63: #{custom-call.59} parent=53 // pred_check
          _
        $region64: #{custom-call.59} parent=53 // pred_check_branch
          %355 = sbr.rel (0) target = $region66
        $region65: #{custom-call.59} parent=53 // pred_region
          // Predicated region
          $region67: #{custom-call.59} parent=65 // pred_check
            _
          $region68: #{custom-call.59} parent=65 // pred_check_branch
            %357 = sbr.rel (0) target = $region70
          $region69: #{custom-call.59} parent=65 // pred_region
            // Predicated region
            $region82: #{custom-call.59} parent=69 // pred_check
              _
            $region83: #{custom-call.59} parent=69 // pred_check_branch
              %373 = sbr.rel (0) target = $region85
            $region84: #{custom-call.59} parent=69 // pred_region
              loop: start=0, step=1, limit=1
              $region86: #{custom-call.59} parent=84 // loop_pre_header
                _
              $region87: #{custom-call.59} parent=84 // loop_header
                %s375 = sphi 0, %s379
                %p376 = scmp.ge.s32.totalorder %s375, 1
                %s380 = sphi %s342, %s342
                %s381 = sphi %s353, %s353
              $region88: #{custom-call.59} parent=84 // loop_header_branch
                %378 = sbr.rel (%p376) target = $region92
              $region89: #{custom-call.59} parent=84 // loop_body
                %v382 = vld [vmem:[%s380] sm:$0xff]
                %383 = vst [vmem:[%s381] sm:$0xff] %v382
              $region90: #{custom-call.59} parent=84 // loop_footer
                %s379 = sadd.s32 1, %s375
              $region91: #{custom-call.59} parent=84 // loop_footer_branch
                %374 = sbr.rel target = $region87
              $region92: #{custom-call.59} parent=84 // loop_exit
                _
            $region85: #{custom-call.59} parent=69 // pred_fallthru
              _
            // Predicated region
            $region93: #{custom-call.59} parent=69 // pred_check
              _
            $region94: #{custom-call.59} parent=69 // pred_check_branch
              %385 = sbr.rel target = $region96
            $region95: #{custom-call.59} parent=69 // pred_region
              _
            $region96: #{custom-call.59} parent=69 // pred_fallthru
              _
          $region70: #{custom-call.59} parent=65 // pred_fallthru
            _
          // Predicated region
          $region71: #{custom-call.59} parent=65 // pred_check
            _
          $region72: #{custom-call.59} parent=65 // pred_check_branch
            %359 = sbr.rel target = $region74
          $region73: #{custom-call.59} parent=65 // pred_region
            %s361 = ssub.s32 256, 1
            loop: start=0, step=1, limit=1
            $region75: #{custom-call.59} parent=73 // loop_pre_header
              _
            $region76: #{custom-call.59} parent=73 // loop_header
              %s363 = sphi 0, %s367
              %p364 = scmp.ge.s32.totalorder %s363, 1
              %s368 = sphi %s342, %s342
              %s369 = sphi %s353, %s353
            $region77: #{custom-call.59} parent=73 // loop_header_branch
              %366 = sbr.rel (%p364) target = $region81
            $region78: #{custom-call.59} parent=73 // loop_body
              %v370 = vld [vmem:[%s368] sm:%s361]
              %371 = vst [vmem:[%s369] sm:%s361] %v370
            $region79: #{custom-call.59} parent=73 // loop_footer
              %s367 = sadd.s32 1, %s363
            $region80: #{custom-call.59} parent=73 // loop_footer_branch
              %362 = sbr.rel target = $region76
            $region81: #{custom-call.59} parent=73 // loop_exit
              _
          $region74: #{custom-call.59} parent=65 // pred_fallthru
            _
        $region66: #{custom-call.59} parent=53 // pred_fallthru
          _
        %386 = vnop
        // Predicated region
        $region97: #{custom-call.59} parent=53 // pred_check
          %p387 = pneg %p34
        $region98: #{custom-call.59} parent=53 // pred_check_branch
          %389 = sbr.rel (%p387) target = $region100
        $region99: #{custom-call.59} parent=53 // pred_region
          %s390 = sshrl.u32 %s14, 3
          %s392 = ssub.s32 64, 64
          %393 = vsyncadd %s344, %s392
          %s394 = smul.addr %s390, 64
          %s395 = scalar_lea.hbm %s2, %s394
          %s397 = sshll.u32 %s347, 4
          %s398 = int_to_ptr.vmem [resolvable:$true] %s397
          %400 = dma.vmem_to_hbm [thread:$0]  %s398, 64, %s395, %s344
        $region100: #{custom-call.59} parent=53 // pred_fallthru
          _
        // Predicated region
        $region101: #{custom-call.59} parent=53 // pred_check
          %p401 = pneg %p62
        $region102: #{custom-call.59} parent=53 // pred_check_branch
          %403 = sbr.rel (%p401) target = $region104
        $region103: #{custom-call.59} parent=53 // pred_region
          %s404 = sshrl.u32 %s14, 3
          %s405 = smul.addr %s404, 4
          %s406 = scalar_lea.vmem %s3, %s405
          // Predicated region
          $region105: #{custom-call.59} parent=103 // pred_check
            _
          $region106: #{custom-call.59} parent=103 // pred_check_branch
            %408 = sbr.rel (0) target = $region108
          $region107: #{custom-call.59} parent=103 // pred_region
            // Predicated region
            $region109: #{custom-call.59} parent=107 // pred_check
              _
            $region110: #{custom-call.59} parent=107 // pred_check_branch
              %410 = sbr.rel target = $region112
            $region111: #{custom-call.59} parent=107 // pred_region
              // Predicated region
              $region124: #{custom-call.59} parent=111 // pred_check
                _
              $region125: #{custom-call.59} parent=111 // pred_check_branch
                %426 = sbr.rel (0) target = $region127
              $region126: #{custom-call.59} parent=111 // pred_region
                %s428 = ssub.s32 16, 1
                loop: start=0, step=1, limit=1
                $region128: #{custom-call.59} parent=126 // loop_pre_header
                  _
                $region129: #{custom-call.59} parent=126 // loop_header
                  %s430 = sphi 0, %s434
                  %p431 = scmp.ge.s32.totalorder %s430, 1
                  %s435 = sphi %s351, %s351
                  %s436 = sphi %s406, %s406
                $region130: #{custom-call.59} parent=126 // loop_header_branch
                  %433 = sbr.rel (%p431) target = $region134
                $region131: #{custom-call.59} parent=126 // loop_body
                  %v437 = vld [vmem:[%s435] sm:%s428]
                  %438 = vst [vmem:[%s436] sm:%s428] %v437
                $region132: #{custom-call.59} parent=126 // loop_footer
                  %s434 = sadd.s32 1, %s430
                $region133: #{custom-call.59} parent=126 // loop_footer_branch
                  %429 = sbr.rel target = $region129
                $region134: #{custom-call.59} parent=126 // loop_exit
                  _
              $region127: #{custom-call.59} parent=111 // pred_fallthru
                _
            $region112: #{custom-call.59} parent=107 // pred_fallthru
              _
            // Predicated region
            $region113: #{custom-call.59} parent=107 // pred_check
              _
            $region114: #{custom-call.59} parent=107 // pred_check_branch
              %412 = sbr.rel (0) target = $region116
            $region115: #{custom-call.59} parent=107 // pred_region
              %s414 = ssub.s32 16, 1
              loop: start=0, step=1, limit=1
              $region117: #{custom-call.59} parent=115 // loop_pre_header
                _
              $region118: #{custom-call.59} parent=115 // loop_header
                %s416 = sphi 0, %s420
                %p417 = scmp.ge.s32.totalorder %s416, 1
                %s421 = sphi %s351, %s351
                %s422 = sphi %s406, %s406
              $region119: #{custom-call.59} parent=115 // loop_header_branch
                %419 = sbr.rel (%p417) target = $region123
              $region120: #{custom-call.59} parent=115 // loop_body
                %v423 = vld [vmem:[%s421] sm:%s414]
                %424 = vst [vmem:[%s422] sm:%s414] %v423
              $region121: #{custom-call.59} parent=115 // loop_footer
                %s420 = sadd.s32 1, %s416
              $region122: #{custom-call.59} parent=115 // loop_footer_branch
                %415 = sbr.rel target = $region118
              $region123: #{custom-call.59} parent=115 // loop_exit
                _
            $region116: #{custom-call.59} parent=107 // pred_fallthru
              _
          $region108: #{custom-call.59} parent=103 // pred_fallthru
            _
          %439 = vnop
        $region104: #{custom-call.59} parent=53 // pred_fallthru
          _
      $region54: #{custom-call.59} parent=5 // pred_fallthru
        _
      %p440 = scmp.le.s32.totalorder 2, %s9
      // Predicated region
      $region135: #{custom-call.59} parent=5 // pred_check
        %p441 = pneg %p440
      $region136: #{custom-call.59} parent=5 // pred_check_branch
        %443 = sbr.rel (%p441) target = $region138
      $region137: #{custom-call.59} parent=5 // pred_region
        %s444 = ssub.s32 %s9, 2
        %s445 = sand.u32 %s15, 1
        %s446 = sand.u32 %s15, 1
        %s447 = smul.addr %s446, 8
        %s448 = scalar_lea.vmem [#allocation1], %s447
        // Predicated region
        $region139: #{custom-call.59} parent=137 // pred_check
          %p449 = pneg %p40
        $region140: #{custom-call.59} parent=137 // pred_check_branch
          %451 = sbr.rel (%p449) target = $region142
        $region141: #{custom-call.59} parent=137 // pred_region
          %s452 = sand.u32 %s25, 1
          %s453 = scalar_lea.sflag [#allocation4], %s452
          %s454 = sand.u32 %s25, 1
          %s455 = smul.addr %s454, 4
          %s456 = scalar_lea.vmem [#allocation3], %s455
          %457 = dma.done %s453, 64
        $region142: #{custom-call.59} parent=137 // pred_fallthru
          _
        // Predicated region
        $region143: #{custom-call.59} parent=137 // pred_check
          %p458 = pneg %p68
        $region144: #{custom-call.59} parent=137 // pred_check_branch
          %460 = sbr.rel (%p458) target = $region146
        $region145: #{custom-call.59} parent=137 // pred_region
          %s461 = sand.u32 %s53, 1
          %s462 = sand.u32 %s53, 1
          %s463 = smul.addr %s462, 4
          %s464 = scalar_lea.vmem [#allocation6], %s463
        $region146: #{custom-call.59} parent=137 // pred_fallthru
          _
      $region138: #{custom-call.59} parent=5 // pred_fallthru
        _
    $region6: #{custom-call.59} parent=1 // loop_footer
      %s13 = sadd.s32 1, %s9
    $region7: #{custom-call.59} parent=1 // loop_footer_branch
      %8 = sbr.rel target = $region3
    $region8: #{custom-call.59} parent=1 // loop_exit
      _
    %465 = vsyncpa [#allocation4], 1
    %s466 = scalar_lea.sflag [#allocation4], 1
    %467 = vsyncpa %s466, 1

// kernel: custom-call.61
$region0: #{custom-call.61}
  %s0 = inlined_call_operand.vmem [shape: f32[4,1,5,5], index: 0, kind: input, shape index: {}]
  %s1 = inlined_call_operand.vmem [shape: f32[4,1,5,5], index: 1, kind: output, shape index: {}]
  $region1: #{custom-call.61} parent=0
    #allocation0 [shape = 'u8[8192]{0}', space=vmem, size = 0x2000, scoped, tag = 'operand span for operand 0']
    #allocation1 [shape = 'u8[8192]{0}', space=vmem, size = 0x2000, scoped, tag = 'operand span for operand 1']
    loop: start=0, step=1, limit=6
    $region2: #{custom-call.61} parent=1 // loop_pre_header
      _
    $region3: #{custom-call.61} parent=1 // loop_header
      %s3 = sphi 0, %s7
      %p4 = scmp.ge.s32.totalorder %s3, 6
      %s10 = sphi 0, %s36
      %s11 = sphi 0, %s32
      %s12 = sphi 0, %s28
      %s13 = sphi 0, %s24
      %s14 = sphi 0, %s10
      %s15 = sphi 0, %s11
      %s16 = sphi 0, %s12
      %s17 = sphi 0, %s13
      %s18 = sphi 0, %s14
      %s19 = sphi 0, %s15
      %s20 = sphi 0, %s16
      %s21 = sphi 0, %s17
    $region4: #{custom-call.61} parent=1 // loop_header_branch
      %6 = sbr.rel (%p4) target = $region8
    $region5: #{custom-call.61} parent=1 // loop_body
      %s8 = ssub.s32 %s3, 1
      %s9 = ssub.s32 %s3, 2
      %s22 = sadd.s32 1, %s13
      %p23 = scmp.ge.s32.totalorder %s22, 1
      %s24 = scalar_select %p23, 0, %s22
      %s25 = sadd.s32 1, %s12
      %s26 = scalar_select %p23, %s25, %s12
      %p27 = scmp.ge.s32.totalorder %s26, 1
      %s28 = scalar_select %p27, 0, %s26
      %s29 = sadd.s32 1, %s11
      %s30 = scalar_select %p27, %s29, %s11
      %p31 = scmp.ge.s32.totalorder %s30, 1
      %s32 = scalar_select %p31, 0, %s30
      %s33 = sadd.s32 1, %s10
      %s34 = scalar_select %p31, %s33, %s10
      %p35 = scmp.ge.s32.totalorder %s34, 4
      %s36 = scalar_select %p35, 0, %s34
      %p37 = scmp.le.s32.totalorder 1, %s3
      %p38 = scmp.lt.s32.totalorder %s3, 5
      %p39 = pnand %p37, %p38
      %p40 = pneg %p39
      // Predicated region
      $region9: #{custom-call.61} parent=5 // pred_check
        _
      $region10: #{custom-call.61} parent=5 // pred_check_branch
        %42 = sbr.rel (%p39) target = $region12
      $region11: #{custom-call.61} parent=5 // pred_region
        %s43 = ssub.s32 %s3, 1
      $region12: #{custom-call.61} parent=5 // pred_fallthru
        _
      %p44 = scmp.lt.s32.totalorder %s3, 4
      // Predicated region
      $region13: #{custom-call.61} parent=5 // pred_check
        %p45 = pneg %p44
      $region14: #{custom-call.61} parent=5 // pred_check_branch
        %47 = sbr.rel (%p45) target = $region16
      $region15: #{custom-call.61} parent=5 // pred_region
        %s48 = sand.u32 %s3, 1
        %s49 = sand.u32 %s3, 1
        %s50 = smul.addr %s49, 8
        %s51 = scalar_lea.vmem [#allocation0], %s50
        %s52 = sadd.s32 %s13, %s12
        %s53 = sadd.s32 %s52, %s11
        %s54 = sadd.s32 %s53, %s10
        %s55 = smul.addr %s54, 8
        %s56 = scalar_lea.vmem %s0, %s55
        // Predicated region
        $region17: #{custom-call.61} parent=15 // pred_check
          _
        $region18: #{custom-call.61} parent=15 // pred_check_branch
          %58 = sbr.rel (0) target = $region20
        $region19: #{custom-call.61} parent=15 // pred_region
          // Predicated region
          $region21: #{custom-call.61} parent=19 // pred_check
            _
          $region22: #{custom-call.61} parent=19 // pred_check_branch
            %60 = sbr.rel (0) target = $region24
          $region23: #{custom-call.61} parent=19 // pred_region
            // Predicated region
            $region36: #{custom-call.61} parent=23 // pred_check
              _
            $region37: #{custom-call.61} parent=23 // pred_check_branch
              %76 = sbr.rel (0) target = $region39
            $region38: #{custom-call.61} parent=23 // pred_region
              loop: start=0, step=1, limit=1
              $region40: #{custom-call.61} parent=38 // loop_pre_header
                _
              $region41: #{custom-call.61} parent=38 // loop_header
                %s78 = sphi 0, %s82
                %p79 = scmp.ge.s32.totalorder %s78, 1
                %s83 = sphi %s56, %s56
                %s84 = sphi %s51, %s51
              $region42: #{custom-call.61} parent=38 // loop_header_branch
                %81 = sbr.rel (%p79) target = $region46
              $region43: #{custom-call.61} parent=38 // loop_body
                %v85 = vld [vmem:[%s83] sm:$0xff]
                %86 = vst [vmem:[%s84] sm:$0xff] %v85
              $region44: #{custom-call.61} parent=38 // loop_footer
                %s82 = sadd.s32 1, %s78
              $region45: #{custom-call.61} parent=38 // loop_footer_branch
                %77 = sbr.rel target = $region41
              $region46: #{custom-call.61} parent=38 // loop_exit
                _
            $region39: #{custom-call.61} parent=23 // pred_fallthru
              _
            // Predicated region
            $region47: #{custom-call.61} parent=23 // pred_check
              _
            $region48: #{custom-call.61} parent=23 // pred_check_branch
              %88 = sbr.rel target = $region50
            $region49: #{custom-call.61} parent=23 // pred_region
              _
            $region50: #{custom-call.61} parent=23 // pred_fallthru
              _
          $region24: #{custom-call.61} parent=19 // pred_fallthru
            _
          // Predicated region
          $region25: #{custom-call.61} parent=19 // pred_check
            _
          $region26: #{custom-call.61} parent=19 // pred_check_branch
            %62 = sbr.rel target = $region28
          $region27: #{custom-call.61} parent=19 // pred_region
            %s64 = ssub.s32 256, 1
            loop: start=0, step=1, limit=1
            $region29: #{custom-call.61} parent=27 // loop_pre_header
              _
            $region30: #{custom-call.61} parent=27 // loop_header
              %s66 = sphi 0, %s70
              %p67 = scmp.ge.s32.totalorder %s66, 1
              %s71 = sphi %s56, %s56
              %s72 = sphi %s51, %s51
            $region31: #{custom-call.61} parent=27 // loop_header_branch
              %69 = sbr.rel (%p67) target = $region35
            $region32: #{custom-call.61} parent=27 // loop_body
              %v73 = vld [vmem:[%s71] sm:%s64]
              %74 = vst [vmem:[%s72] sm:%s64] %v73
            $region33: #{custom-call.61} parent=27 // loop_footer
              %s70 = sadd.s32 1, %s66
            $region34: #{custom-call.61} parent=27 // loop_footer_branch
              %65 = sbr.rel target = $region30
            $region35: #{custom-call.61} parent=27 // loop_exit
              _
          $region28: #{custom-call.61} parent=19 // pred_fallthru
            _
        $region20: #{custom-call.61} parent=15 // pred_fallthru
          _
        %89 = vnop
      $region16: #{custom-call.61} parent=5 // pred_fallthru
        _
      %p90 = scmp.le.s32.totalorder 1, %s3
      %p91 = scmp.lt.s32.totalorder %s3, 5
      %p92 = pnand %p90, %p91
      %p93 = pneg %p92
      // Predicated region
      $region51: #{custom-call.61} parent=5 // pred_check
        _
      $region52: #{custom-call.61} parent=5 // pred_check_branch
        %95 = sbr.rel (%p92) target = $region54
      $region53: #{custom-call.61} parent=5 // pred_region
        #allocation2 [shape = 'f32[5,5]{1,0}', space=vmem, size = 0x1000, scoped, tag = 'rescaled input a']
        %s96 = ssub.s32 %s3, 1
        %s97 = sand.u32 %s8, 1
        %s98 = sand.u32 %s8, 1
        %s99 = smul.addr %s98, 8
        %s100 = scalar_lea.vmem [#allocation0], %s99
        %s101 = sand.u32 %s8, 1
        %s102 = sand.u32 %s8, 1
        %s103 = smul.addr %s102, 8
        %s104 = scalar_lea.vmem [#allocation0], %s103
        %s105 = sand.u32 %s8, 1
        %s106 = sand.u32 %s8, 1
        %s107 = smul.addr %s106, 8
        %s108 = scalar_lea.vmem [#allocation1], %s107
        %v109 = vlaneseq
        %v110 = vand.u32 %v109, 127
        %vm111 = vcmp.lt.s32.totalorder %v110, 5
        %v112 = vlaneseq
        %v113 = vshrl.u32 %v112, 7
        %vm115 = vcmp.eq.s32.totalorder %v113, %v110
        %v116 = vld [vmem:[%s100] sm:$0xff]
        %v117 = vsel %vm115, %v116, 0.0
        %118 = vadd.xlane.f32.xlu0 %v117
        %v119 = vpop.xlane.xlu0 %118
        %vm120 = vcmp.ge.s32.totalorder %v113, %v110
        %vm121 = vmand %vm120, %vm111
        %v122 = vsel %vm121, %v116, 0.0
        %v123 = vrcp.pop %v119
        %v124 = vmul.f32 %v122, %v123
        %125 = vst [vmem:[#allocation2] sm:$0xff] %v124
        %v126 = vlaneseq
        %v127 = vand.u32 %v126, 127
        %v128 = vlaneseq
        %v129 = vshrl.u32 %v128, 7
        %vm131 = vcmp.eq.s32.totalorder %v127, %v129
        %v132 = vlaneseq
        %v133 = vand.u32 %v132, 127
        %vm134 = vcmp.eq.s32.totalorder %v133, 0
        %v135 = vsel %vm134, 1.0, -1.0
        %v136 = vsel %vm131, %v135, 0.0
        %s137 = scalar_lea.vmem [#allocation2], 1
        %v138 = vld [vmem:[%s137] ss:$0 sm:$0xff]
        %v139 = vxor.u32 %v138, 2147483648
        %v140 = vlaneseq
        %v141 = vand.u32 %v140, 127
        %vm142 = vcmp.eq.s32.totalorder %v141, 1
        %v143 = vmul.f32 %v139, %v136
        %144 = vadd.xlane.f32.xlu0 %v143
        %v145 = vpop.xlane.xlu0 %144
        %v146 = vsel %vm142, %v145, %v136
        %s147 = scalar_lea.vmem [#allocation2], 2
        %v148 = vld [vmem:[%s147] ss:$0 sm:$0xff]
        %v149 = vxor.u32 %v148, 2147483648
        %v150 = vlaneseq
        %v151 = vand.u32 %v150, 127
        %vm152 = vcmp.eq.s32.totalorder %v151, 2
        %v153 = vmul.f32 %v149, %v146
        %154 = vadd.xlane.f32.xlu0 %v153
        %v155 = vpop.xlane.xlu0 %154
        %v156 = vsel %vm152, %v155, %v146
        %s157 = scalar_lea.vmem [#allocation2], 3
        %v158 = vld [vmem:[%s157] ss:$0 sm:$0xff]
        %v159 = vxor.u32 %v158, 2147483648
        %v160 = vlaneseq
        %v161 = vand.u32 %v160, 127
        %vm162 = vcmp.eq.s32.totalorder %v161, 3
        %v163 = vmul.f32 %v159, %v156
        %164 = vadd.xlane.f32.xlu0 %v163
        %v165 = vpop.xlane.xlu0 %164
        %v166 = vsel %vm162, %v165, %v156
        %s167 = scalar_lea.vmem [#allocation2], 4
        %v168 = vld [vmem:[%s167] ss:$0 sm:$0xff]
        %v169 = vxor.u32 %v168, 2147483648
        %v170 = vlaneseq
        %v171 = vand.u32 %v170, 127
        %vm172 = vcmp.eq.s32.totalorder %v171, 4
        %v173 = vmul.f32 %v169, %v166
        %174 = vadd.xlane.f32.xlu0 %v173
        %v175 = vpop.xlane.xlu0 %174
        %v176 = vsel %vm172, %v175, %v166
        %v177 = vrcp.pop %v119
        %v178 = vmul.f32 %v176, %v177
        %vm179 = vweird.f32 %v119
        %v180 = vsel %vm179, %v176, %v178
        %181 = vst [vmem:[%s108] sm:$0xff] %v180
        %s182 = sand.u32 %s8, 1
        %s183 = sand.u32 %s8, 1
        %s184 = smul.addr %s183, 8
        %s185 = scalar_lea.vmem [#allocation1], %s184
        %s186 = sadd.s32 %s17, %s16
        %s187 = sadd.s32 %s186, %s15
        %s188 = sadd.s32 %s187, %s14
        %s189 = smul.addr %s188, 8
        %s190 = scalar_lea.vmem %s1, %s189
        // Predicated region
        $region55: #{custom-call.61} parent=53 // pred_check
          _
        $region56: #{custom-call.61} parent=53 // pred_check_branch
          %192 = sbr.rel (0) target = $region58
        $region57: #{custom-call.61} parent=53 // pred_region
          // Predicated region
          $region59: #{custom-call.61} parent=57 // pred_check
            _
          $region60: #{custom-call.61} parent=57 // pred_check_branch
            %194 = sbr.rel (0) target = $region62
          $region61: #{custom-call.61} parent=57 // pred_region
            // Predicated region
            $region74: #{custom-call.61} parent=61 // pred_check
              _
            $region75: #{custom-call.61} parent=61 // pred_check_branch
              %210 = sbr.rel (0) target = $region77
            $region76: #{custom-call.61} parent=61 // pred_region
              loop: start=0, step=1, limit=1
              $region78: #{custom-call.61} parent=76 // loop_pre_header
                _
              $region79: #{custom-call.61} parent=76 // loop_header
                %s212 = sphi 0, %s216
                %p213 = scmp.ge.s32.totalorder %s212, 1
                %s217 = sphi %s185, %s185
                %s218 = sphi %s190, %s190
              $region80: #{custom-call.61} parent=76 // loop_header_branch
                %215 = sbr.rel (%p213) target = $region84
              $region81: #{custom-call.61} parent=76 // loop_body
                %v219 = vld [vmem:[%s217] sm:$0xff]
                %220 = vst [vmem:[%s218] sm:$0xff] %v219
              $region82: #{custom-call.61} parent=76 // loop_footer
                %s216 = sadd.s32 1, %s212
              $region83: #{custom-call.61} parent=76 // loop_footer_branch
                %211 = sbr.rel target = $region79
              $region84: #{custom-call.61} parent=76 // loop_exit
                _
            $region77: #{custom-call.61} parent=61 // pred_fallthru
              _
            // Predicated region
            $region85: #{custom-call.61} parent=61 // pred_check
              _
            $region86: #{custom-call.61} parent=61 // pred_check_branch
              %222 = sbr.rel target = $region88
            $region87: #{custom-call.61} parent=61 // pred_region
              _
            $region88: #{custom-call.61} parent=61 // pred_fallthru
              _
          $region62: #{custom-call.61} parent=57 // pred_fallthru
            _
          // Predicated region
          $region63: #{custom-call.61} parent=57 // pred_check
            _
          $region64: #{custom-call.61} parent=57 // pred_check_branch
            %196 = sbr.rel target = $region66
          $region65: #{custom-call.61} parent=57 // pred_region
            %s198 = ssub.s32 256, 1
            loop: start=0, step=1, limit=1
            $region67: #{custom-call.61} parent=65 // loop_pre_header
              _
            $region68: #{custom-call.61} parent=65 // loop_header
              %s200 = sphi 0, %s204
              %p201 = scmp.ge.s32.totalorder %s200, 1
              %s205 = sphi %s185, %s185
              %s206 = sphi %s190, %s190
            $region69: #{custom-call.61} parent=65 // loop_header_branch
              %203 = sbr.rel (%p201) target = $region73
            $region70: #{custom-call.61} parent=65 // loop_body
              %v207 = vld [vmem:[%s205] sm:%s198]
              %208 = vst [vmem:[%s206] sm:%s198] %v207
            $region71: #{custom-call.61} parent=65 // loop_footer
              %s204 = sadd.s32 1, %s200
            $region72: #{custom-call.61} parent=65 // loop_footer_branch
              %199 = sbr.rel target = $region68
            $region73: #{custom-call.61} parent=65 // loop_exit
              _
          $region66: #{custom-call.61} parent=57 // pred_fallthru
            _
        $region58: #{custom-call.61} parent=53 // pred_fallthru
          _
        %223 = vnop
      $region54: #{custom-call.61} parent=5 // pred_fallthru
        _
      %p224 = scmp.le.s32.totalorder 2, %s3
      // Predicated region
      $region89: #{custom-call.61} parent=5 // pred_check
        %p225 = pneg %p224
      $region90: #{custom-call.61} parent=5 // pred_check_branch
        %227 = sbr.rel (%p225) target = $region92
      $region91: #{custom-call.61} parent=5 // pred_region
        %s228 = ssub.s32 %s3, 2
        %s229 = sand.u32 %s9, 1
        %s230 = sand.u32 %s9, 1
        %s231 = smul.addr %s230, 8
        %s232 = scalar_lea.vmem [#allocation1], %s231
      $region92: #{custom-call.61} parent=5 // pred_fallthru
        _
    $region6: #{custom-call.61} parent=1 // loop_footer
      %s7 = sadd.s32 1, %s3
    $region7: #{custom-call.61} parent=1 // loop_footer_branch
      %2 = sbr.rel target = $region3
    $region8: #{custom-call.61} parent=1 // loop_exit
      _

// kernel: custom-call.60
$region0: #{custom-call.60}
  %s0 = inlined_call_operand.vmem [shape: f32[4,1,5,5], index: 0, kind: input, shape index: {}]
  %s1 = inlined_call_operand.vmem [shape: f32[4,1,5,5], index: 1, kind: output, shape index: {}]
  $region1: #{custom-call.60} parent=0
    #allocation0 [shape = 'u8[8192]{0}', space=vmem, size = 0x2000, scoped, tag = 'operand span for operand 0']
    #allocation1 [shape = 'u8[8192]{0}', space=vmem, size = 0x2000, scoped, tag = 'operand span for operand 1']
    loop: start=0, step=1, limit=6
    $region2: #{custom-call.60} parent=1 // loop_pre_header
      _
    $region3: #{custom-call.60} parent=1 // loop_header
      %s3 = sphi 0, %s7
      %p4 = scmp.ge.s32.totalorder %s3, 6
      %s10 = sphi 0, %s36
      %s11 = sphi 0, %s32
      %s12 = sphi 0, %s28
      %s13 = sphi 0, %s24
      %s14 = sphi 0, %s10
      %s15 = sphi 0, %s11
      %s16 = sphi 0, %s12
      %s17 = sphi 0, %s13
      %s18 = sphi 0, %s14
      %s19 = sphi 0, %s15
      %s20 = sphi 0, %s16
      %s21 = sphi 0, %s17
    $region4: #{custom-call.60} parent=1 // loop_header_branch
      %6 = sbr.rel (%p4) target = $region8
    $region5: #{custom-call.60} parent=1 // loop_body
      %s8 = ssub.s32 %s3, 1
      %s9 = ssub.s32 %s3, 2
      %s22 = sadd.s32 1, %s13
      %p23 = scmp.ge.s32.totalorder %s22, 1
      %s24 = scalar_select %p23, 0, %s22
      %s25 = sadd.s32 1, %s12
      %s26 = scalar_select %p23, %s25, %s12
      %p27 = scmp.ge.s32.totalorder %s26, 1
      %s28 = scalar_select %p27, 0, %s26
      %s29 = sadd.s32 1, %s11
      %s30 = scalar_select %p27, %s29, %s11
      %p31 = scmp.ge.s32.totalorder %s30, 1
      %s32 = scalar_select %p31, 0, %s30
      %s33 = sadd.s32 1, %s10
      %s34 = scalar_select %p31, %s33, %s10
      %p35 = scmp.ge.s32.totalorder %s34, 4
      %s36 = scalar_select %p35, 0, %s34
      %p37 = scmp.le.s32.totalorder 1, %s3
      %p38 = scmp.lt.s32.totalorder %s3, 5
      %p39 = pnand %p37, %p38
      %p40 = pneg %p39
      // Predicated region
      $region9: #{custom-call.60} parent=5 // pred_check
        _
      $region10: #{custom-call.60} parent=5 // pred_check_branch
        %42 = sbr.rel (%p39) target = $region12
      $region11: #{custom-call.60} parent=5 // pred_region
        %s43 = ssub.s32 %s3, 1
      $region12: #{custom-call.60} parent=5 // pred_fallthru
        _
      %p44 = scmp.lt.s32.totalorder %s3, 4
      // Predicated region
      $region13: #{custom-call.60} parent=5 // pred_check
        %p45 = pneg %p44
      $region14: #{custom-call.60} parent=5 // pred_check_branch
        %47 = sbr.rel (%p45) target = $region16
      $region15: #{custom-call.60} parent=5 // pred_region
        %s48 = sand.u32 %s3, 1
        %s49 = sand.u32 %s3, 1
        %s50 = smul.addr %s49, 8
        %s51 = scalar_lea.vmem [#allocation0], %s50
        %s52 = sadd.s32 %s13, %s12
        %s53 = sadd.s32 %s52, %s11
        %s54 = sadd.s32 %s53, %s10
        %s55 = smul.addr %s54, 8
        %s56 = scalar_lea.vmem %s0, %s55
        // Predicated region
        $region17: #{custom-call.60} parent=15 // pred_check
          _
        $region18: #{custom-call.60} parent=15 // pred_check_branch
          %58 = sbr.rel (0) target = $region20
        $region19: #{custom-call.60} parent=15 // pred_region
          // Predicated region
          $region21: #{custom-call.60} parent=19 // pred_check
            _
          $region22: #{custom-call.60} parent=19 // pred_check_branch
            %60 = sbr.rel (0) target = $region24
          $region23: #{custom-call.60} parent=19 // pred_region
            // Predicated region
            $region36: #{custom-call.60} parent=23 // pred_check
              _
            $region37: #{custom-call.60} parent=23 // pred_check_branch
              %76 = sbr.rel (0) target = $region39
            $region38: #{custom-call.60} parent=23 // pred_region
              loop: start=0, step=1, limit=1
              $region40: #{custom-call.60} parent=38 // loop_pre_header
                _
              $region41: #{custom-call.60} parent=38 // loop_header
                %s78 = sphi 0, %s82
                %p79 = scmp.ge.s32.totalorder %s78, 1
                %s83 = sphi %s56, %s56
                %s84 = sphi %s51, %s51
              $region42: #{custom-call.60} parent=38 // loop_header_branch
                %81 = sbr.rel (%p79) target = $region46
              $region43: #{custom-call.60} parent=38 // loop_body
                %v85 = vld [vmem:[%s83] sm:$0xff]
                %86 = vst [vmem:[%s84] sm:$0xff] %v85
              $region44: #{custom-call.60} parent=38 // loop_footer
                %s82 = sadd.s32 1, %s78
              $region45: #{custom-call.60} parent=38 // loop_footer_branch
                %77 = sbr.rel target = $region41
              $region46: #{custom-call.60} parent=38 // loop_exit
                _
            $region39: #{custom-call.60} parent=23 // pred_fallthru
              _
            // Predicated region
            $region47: #{custom-call.60} parent=23 // pred_check
              _
            $region48: #{custom-call.60} parent=23 // pred_check_branch
              %88 = sbr.rel target = $region50
            $region49: #{custom-call.60} parent=23 // pred_region
              _
            $region50: #{custom-call.60} parent=23 // pred_fallthru
              _
          $region24: #{custom-call.60} parent=19 // pred_fallthru
            _
          // Predicated region
          $region25: #{custom-call.60} parent=19 // pred_check
            _
          $region26: #{custom-call.60} parent=19 // pred_check_branch
            %62 = sbr.rel target = $region28
          $region27: #{custom-call.60} parent=19 // pred_region
            %s64 = ssub.s32 256, 1
            loop: start=0, step=1, limit=1
            $region29: #{custom-call.60} parent=27 // loop_pre_header
              _
            $region30: #{custom-call.60} parent=27 // loop_header
              %s66 = sphi 0, %s70
              %p67 = scmp.ge.s32.totalorder %s66, 1
              %s71 = sphi %s56, %s56
              %s72 = sphi %s51, %s51
            $region31: #{custom-call.60} parent=27 // loop_header_branch
              %69 = sbr.rel (%p67) target = $region35
            $region32: #{custom-call.60} parent=27 // loop_body
              %v73 = vld [vmem:[%s71] sm:%s64]
              %74 = vst [vmem:[%s72] sm:%s64] %v73
            $region33: #{custom-call.60} parent=27 // loop_footer
              %s70 = sadd.s32 1, %s66
            $region34: #{custom-call.60} parent=27 // loop_footer_branch
              %65 = sbr.rel target = $region30
            $region35: #{custom-call.60} parent=27 // loop_exit
              _
          $region28: #{custom-call.60} parent=19 // pred_fallthru
            _
        $region20: #{custom-call.60} parent=15 // pred_fallthru
          _
        %89 = vnop
      $region16: #{custom-call.60} parent=5 // pred_fallthru
        _
      %p90 = scmp.le.s32.totalorder 1, %s3
      %p91 = scmp.lt.s32.totalorder %s3, 5
      %p92 = pnand %p90, %p91
      %p93 = pneg %p92
      // Predicated region
      $region51: #{custom-call.60} parent=5 // pred_check
        _
      $region52: #{custom-call.60} parent=5 // pred_check_branch
        %95 = sbr.rel (%p92) target = $region54
      $region53: #{custom-call.60} parent=5 // pred_region
        #allocation2 [shape = 'f32[5,5]{1,0}', space=vmem, size = 0x1000, scoped, tag = 'rescaled input a']
        %s96 = ssub.s32 %s3, 1
        %s97 = sand.u32 %s8, 1
        %s98 = sand.u32 %s8, 1
        %s99 = smul.addr %s98, 8
        %s100 = scalar_lea.vmem [#allocation0], %s99
        %s101 = sand.u32 %s8, 1
        %s102 = sand.u32 %s8, 1
        %s103 = smul.addr %s102, 8
        %s104 = scalar_lea.vmem [#allocation0], %s103
        %s105 = sand.u32 %s8, 1
        %s106 = sand.u32 %s8, 1
        %s107 = smul.addr %s106, 8
        %s108 = scalar_lea.vmem [#allocation1], %s107
        %v109 = vlaneseq
        %v110 = vand.u32 %v109, 127
        %vm111 = vcmp.lt.s32.totalorder %v110, 5
        %v112 = vlaneseq
        %v113 = vshrl.u32 %v112, 7
        %vm115 = vcmp.eq.s32.totalorder %v113, %v110
        %v116 = vld [vmem:[%s100] sm:$0xff]
        %v117 = vsel %vm115, %v116, 0.0
        %118 = vadd.xlane.f32.xlu0 %v117
        %v119 = vpop.xlane.xlu0 %118
        %vm120 = vcmp.le.s32.totalorder %v113, %v110
        %vm121 = vmand %vm120, %vm111
        %v122 = vsel %vm121, %v116, 0.0
        %v123 = vrcp.pop %v119
        %v124 = vmul.f32 %v122, %v123
        %125 = vst [vmem:[#allocation2] sm:$0xff] %v124
        %v126 = vlaneseq
        %v127 = vand.u32 %v126, 127
        %v128 = vlaneseq
        %v129 = vshrl.u32 %v128, 7
        %vm131 = vcmp.eq.s32.totalorder %v127, %v129
        %v132 = vlaneseq
        %v133 = vand.u32 %v132, 127
        %vm134 = vcmp.eq.s32.totalorder %v133, 4
        %v135 = vsel %vm134, 1.0, -1.0
        %v136 = vsel %vm131, %v135, 0.0
        %s137 = scalar_lea.vmem [#allocation2], 3
        %v138 = vld [vmem:[%s137] ss:$0 sm:$0xff]
        %v139 = vxor.u32 %v138, 2147483648
        %v140 = vlaneseq
        %v141 = vand.u32 %v140, 127
        %vm142 = vcmp.eq.s32.totalorder %v141, 3
        %v143 = vmul.f32 %v139, %v136
        %144 = vadd.xlane.f32.xlu0 %v143
        %v145 = vpop.xlane.xlu0 %144
        %v146 = vsel %vm142, %v145, %v136
        %s147 = scalar_lea.vmem [#allocation2], 2
        %v148 = vld [vmem:[%s147] ss:$0 sm:$0xff]
        %v149 = vxor.u32 %v148, 2147483648
        %v150 = vlaneseq
        %v151 = vand.u32 %v150, 127
        %vm152 = vcmp.eq.s32.totalorder %v151, 2
        %v153 = vmul.f32 %v149, %v146
        %154 = vadd.xlane.f32.xlu0 %v153
        %v155 = vpop.xlane.xlu0 %154
        %v156 = vsel %vm152, %v155, %v146
        %s157 = scalar_lea.vmem [#allocation2], 1
        %v158 = vld [vmem:[%s157] ss:$0 sm:$0xff]
        %v159 = vxor.u32 %v158, 2147483648
        %v160 = vlaneseq
        %v161 = vand.u32 %v160, 127
        %vm162 = vcmp.eq.s32.totalorder %v161, 1
        %v163 = vmul.f32 %v159, %v156
        %164 = vadd.xlane.f32.xlu0 %v163
        %v165 = vpop.xlane.xlu0 %164
        %v166 = vsel %vm162, %v165, %v156
        %v167 = vld [vmem:[#allocation2] ss:$0 sm:$0xff]
        %v168 = vxor.u32 %v167, 2147483648
        %v169 = vlaneseq
        %v170 = vand.u32 %v169, 127
        %vm171 = vcmp.eq.s32.totalorder %v170, 0
        %v172 = vmul.f32 %v168, %v166
        %173 = vadd.xlane.f32.xlu0 %v172
        %v174 = vpop.xlane.xlu0 %173
        %v175 = vsel %vm171, %v174, %v166
        %v176 = vrcp.pop %v119
        %v177 = vmul.f32 %v175, %v176
        %vm178 = vweird.f32 %v119
        %v179 = vsel %vm178, %v175, %v177
        %180 = vst [vmem:[%s108] sm:$0xff] %v179
        %s181 = sand.u32 %s8, 1
        %s182 = sand.u32 %s8, 1
        %s183 = smul.addr %s182, 8
        %s184 = scalar_lea.vmem [#allocation1], %s183
        %s185 = sadd.s32 %s17, %s16
        %s186 = sadd.s32 %s185, %s15
        %s187 = sadd.s32 %s186, %s14
        %s188 = smul.addr %s187, 8
        %s189 = scalar_lea.vmem %s1, %s188
        // Predicated region
        $region55: #{custom-call.60} parent=53 // pred_check
          _
        $region56: #{custom-call.60} parent=53 // pred_check_branch
          %191 = sbr.rel (0) target = $region58
        $region57: #{custom-call.60} parent=53 // pred_region
          // Predicated region
          $region59: #{custom-call.60} parent=57 // pred_check
            _
          $region60: #{custom-call.60} parent=57 // pred_check_branch
            %193 = sbr.rel (0) target = $region62
          $region61: #{custom-call.60} parent=57 // pred_region
            // Predicated region
            $region74: #{custom-call.60} parent=61 // pred_check
              _
            $region75: #{custom-call.60} parent=61 // pred_check_branch
              %209 = sbr.rel (0) target = $region77
            $region76: #{custom-call.60} parent=61 // pred_region
              loop: start=0, step=1, limit=1
              $region78: #{custom-call.60} parent=76 // loop_pre_header
                _
              $region79: #{custom-call.60} parent=76 // loop_header
                %s211 = sphi 0, %s215
                %p212 = scmp.ge.s32.totalorder %s211, 1
                %s216 = sphi %s184, %s184
                %s217 = sphi %s189, %s189
              $region80: #{custom-call.60} parent=76 // loop_header_branch
                %214 = sbr.rel (%p212) target = $region84
              $region81: #{custom-call.60} parent=76 // loop_body
                %v218 = vld [vmem:[%s216] sm:$0xff]
                %219 = vst [vmem:[%s217] sm:$0xff] %v218
              $region82: #{custom-call.60} parent=76 // loop_footer
                %s215 = sadd.s32 1, %s211
              $region83: #{custom-call.60} parent=76 // loop_footer_branch
                %210 = sbr.rel target = $region79
              $region84: #{custom-call.60} parent=76 // loop_exit
                _
            $region77: #{custom-call.60} parent=61 // pred_fallthru
              _
            // Predicated region
            $region85: #{custom-call.60} parent=61 // pred_check
              _
            $region86: #{custom-call.60} parent=61 // pred_check_branch
              %221 = sbr.rel target = $region88
            $region87: #{custom-call.60} parent=61 // pred_region
              _
            $region88: #{custom-call.60} parent=61 // pred_fallthru
              _
          $region62: #{custom-call.60} parent=57 // pred_fallthru
            _
          // Predicated region
          $region63: #{custom-call.60} parent=57 // pred_check
            _
          $region64: #{custom-call.60} parent=57 // pred_check_branch
            %195 = sbr.rel target = $region66
          $region65: #{custom-call.60} parent=57 // pred_region
            %s197 = ssub.s32 256, 1
            loop: start=0, step=1, limit=1
            $region67: #{custom-call.60} parent=65 // loop_pre_header
              _
            $region68: #{custom-call.60} parent=65 // loop_header
              %s199 = sphi 0, %s203
              %p200 = scmp.ge.s32.totalorder %s199, 1
              %s204 = sphi %s184, %s184
              %s205 = sphi %s189, %s189
            $region69: #{custom-call.60} parent=65 // loop_header_branch
              %202 = sbr.rel (%p200) target = $region73
            $region70: #{custom-call.60} parent=65 // loop_body
              %v206 = vld [vmem:[%s204] sm:%s197]
              %207 = vst [vmem:[%s205] sm:%s197] %v206
            $region71: #{custom-call.60} parent=65 // loop_footer
              %s203 = sadd.s32 1, %s199
            $region72: #{custom-call.60} parent=65 // loop_footer_branch
              %198 = sbr.rel target = $region68
            $region73: #{custom-call.60} parent=65 // loop_exit
              _
          $region66: #{custom-call.60} parent=57 // pred_fallthru
            _
        $region58: #{custom-call.60} parent=53 // pred_fallthru
          _
        %222 = vnop
      $region54: #{custom-call.60} parent=5 // pred_fallthru
        _
      %p223 = scmp.le.s32.totalorder 2, %s3
      // Predicated region
      $region89: #{custom-call.60} parent=5 // pred_check
        %p224 = pneg %p223
      $region90: #{custom-call.60} parent=5 // pred_check_branch
        %226 = sbr.rel (%p224) target = $region92
      $region91: #{custom-call.60} parent=5 // pred_region
        %s227 = ssub.s32 %s3, 2
        %s228 = sand.u32 %s9, 1
        %s229 = sand.u32 %s9, 1
        %s230 = smul.addr %s229, 8
        %s231 = scalar_lea.vmem [#allocation1], %s230
      $region92: #{custom-call.60} parent=5 // pred_fallthru
        _
    $region6: #{custom-call.60} parent=1 // loop_footer
      %s7 = sadd.s32 1, %s3
    $region7: #{custom-call.60} parent=1 // loop_footer_branch
      %2 = sbr.rel target = $region3
    $region8: #{custom-call.60} parent=1 // loop_exit
      _

// kernel: forward.6
$region0: #{forward.6}
  #allocation0 [shape = 'u32[]', space=smem, size = 0x4, offset = 0x4, fixed_abs, tag = 'smem constant byte address 0x4 - core index']
  #allocation1 [shape = 'u32[144,128]{1,0:T(1,128)}', space=vmem, size = 0x12000, scoped, tag = 'internal scratch']
  %s0 = inlined_call_operand.vmem [shape: f32[8,768], index: 0, kind: input, shape index: {}]
  %s1 = inlined_call_operand.vmem [shape: f32[8,768], index: 1, kind: input, shape index: {}]
  %s2 = inlined_call_operand.vmem [shape: f32[5,8,768], index: 2, kind: input, shape index: {}]
  %s3 = inlined_call_operand.vmem [shape: f32[8,5], index: 3, kind: output, shape index: {0}]
  %s4 = inlined_call_operand.vmem [shape: f32[8,25], index: 4, kind: output, shape index: {1}]
  %5 = xla_tuple %s3, %s4
  %s6 = sld [smem:[#allocation0]]
  $region30: #{forward.6} parent=0
    _
  %s8 = ssub.s32 1, %s6
  %s9 = scalar_select 0, %s8, %s6
  // Predicated region
  $region2: #{forward.6} parent=0 // pred_check
    _
  $region3: #{forward.6} parent=0 // pred_check_branch
    %11 = sbr.rel (0) target = $region5
  $region4: #{forward.6} parent=0 // pred_region
    _
  $region5: #{forward.6} parent=0 // pred_fallthru
    _
  // Predicated region
  $region6: #{forward.6} parent=0 // pred_check
    _
  $region7: #{forward.6} parent=0 // pred_check_branch
    %13 = sbr.rel (0) target = $region9
  $region8: #{forward.6} parent=0 // pred_region
    _
  $region9: #{forward.6} parent=0 // pred_fallthru
    _
  // Predicated region
  $region10: #{forward.6} parent=0 // pred_check
    _
  $region11: #{forward.6} parent=0 // pred_check_branch
    %15 = sbr.rel (0) target = $region13
  $region12: #{forward.6} parent=0 // pred_region
    _
  $region13: #{forward.6} parent=0 // pred_fallthru
    _
  %v16 = vld [vmem:[%s0] sm:$0xff]
  %v17 = vld [vmem:[%s0 + $0x8] sm:$0xff]
  %v18 = vld [vmem:[%s0 + $0x10] sm:$0xff]
  %v19 = vld [vmem:[%s0 + $0x18] sm:$0xff]
  %v20 = vld [vmem:[%s0 + $0x20] sm:$0xff]
  %v21 = vld [vmem:[%s0 + $0x28] sm:$0xff]
  %v22 = vld [vmem:[%s1] sm:$0xff]
  %v23 = vld [vmem:[%s1 + $0x8] sm:$0xff]
  %v24 = vld [vmem:[%s1 + $0x10] sm:$0xff]
  %v25 = vld [vmem:[%s1 + $0x18] sm:$0xff]
  %v26 = vld [vmem:[%s1 + $0x20] sm:$0xff]
  %v27 = vld [vmem:[%s1 + $0x28] sm:$0xff]
  %vm28 = vcmp.gt.f32.partialorder %v22, 0.0
  %vm29 = vcmp.gt.f32.partialorder %v23, 0.0
  %vm30 = vcmp.gt.f32.partialorder %v24, 0.0
  %vm31 = vcmp.gt.f32.partialorder %v25, 0.0
  %vm32 = vcmp.gt.f32.partialorder %v26, 0.0
  %vm33 = vcmp.gt.f32.partialorder %v27, 0.0
  %vm34 = vcmp.lt.f32.partialorder %v22, 0.0
  %vm35 = vcmp.lt.f32.partialorder %v23, 0.0
  %vm36 = vcmp.lt.f32.partialorder %v24, 0.0
  %vm37 = vcmp.lt.f32.partialorder %v25, 0.0
  %vm38 = vcmp.lt.f32.partialorder %v26, 0.0
  %vm39 = vcmp.lt.f32.partialorder %v27, 0.0
  %v40 = vsel %vm34, 2.220446e-13, 0.0
  %v41 = vsel %vm35, 2.220446e-13, 0.0
  %v42 = vsel %vm36, 2.220446e-13, 0.0
  %v43 = vsel %vm37, 2.220446e-13, 0.0
  %v44 = vsel %vm38, 2.220446e-13, 0.0
  %v45 = vsel %vm39, 2.220446e-13, 0.0
  %v46 = vsel %vm28, %v22, %v40
  %v47 = vsel %vm29, %v23, %v41
  %v48 = vsel %vm30, %v24, %v42
  %v49 = vsel %vm31, %v25, %v43
  %v50 = vsel %vm32, %v26, %v44
  %v51 = vsel %vm33, %v27, %v45
  %v52 = vrcp.pop %v46
  %v53 = vrcp.pop %v47
  %v54 = vrcp.pop %v48
  %v55 = vrcp.pop %v49
  %v56 = vrcp.pop %v50
  %v57 = vrcp.pop %v51
  %v58 = vsub.f32 %v16, %v46
  %v59 = vsub.f32 %v17, %v47
  %v60 = vsub.f32 %v18, %v48
  %v61 = vsub.f32 %v19, %v49
  %v62 = vsub.f32 %v20, %v50
  %v63 = vsub.f32 %v21, %v51
  %v64 = vmul.f32 %v58, %v52
  %v65 = vmul.f32 %v59, %v53
  %v66 = vmul.f32 %v60, %v54
  %v67 = vmul.f32 %v61, %v55
  %v68 = vmul.f32 %v62, %v56
  %v69 = vmul.f32 %v63, %v57
  %v70 = vadd.f32 %v64, 1.0
  %v71 = vadd.f32 %v65, 1.0
  %v72 = vadd.f32 %v66, 1.0
  %v73 = vadd.f32 %v67, 1.0
  %v74 = vadd.f32 %v68, 1.0
  %v75 = vadd.f32 %v69, 1.0
  %v76 = vmul.f32 %v70, %v52
  %v77 = vmul.f32 %v71, %v53
  %v78 = vmul.f32 %v72, %v54
  %v79 = vmul.f32 %v73, %v55
  %v80 = vmul.f32 %v74, %v56
  %v81 = vmul.f32 %v75, %v57
  %v82 = vld [vmem:[%s2] sm:$0xff]
  %v83 = vld [vmem:[%s2 + $0x8] sm:$0xff]
  %v84 = vld [vmem:[%s2 + $0x10] sm:$0xff]
  %v85 = vld [vmem:[%s2 + $0x18] sm:$0xff]
  %v86 = vld [vmem:[%s2 + $0x20] sm:$0xff]
  %v87 = vld [vmem:[%s2 + $0x28] sm:$0xff]
  %v88 = vmul.f32 %v64, %v82
  %v89 = vmul.f32 %v65, %v83
  %v90 = vmul.f32 %v66, %v84
  %v91 = vmul.f32 %v67, %v85
  %v92 = vmul.f32 %v68, %v86
  %v93 = vmul.f32 %v69, %v87
  %v94 = vadd.f32 %v88, %v89
  %v95 = vadd.f32 %v94, %v90
  %v96 = vadd.f32 %v95, %v91
  %v97 = vadd.f32 %v96, %v92
  %v98 = vadd.f32 %v97, %v93
  %99 = vadd.xlane.f32.xlu0 %v98
  %v100 = vpop.xlane.xlu0 %99
  %vm101 = vcmask 7168
  %102 = vst.msk [vmem:[%s3] sm:$0xff] %vm101, %v100
  %v103 = vmul.f32 %v76, %v82
  %v104 = vmul.f32 %v77, %v83
  %v105 = vmul.f32 %v78, %v84
  %v106 = vmul.f32 %v79, %v85
  %v107 = vmul.f32 %v80, %v86
  %v108 = vmul.f32 %v81, %v87
  %v109 = vmul.f32 %v103, %v82
  %v110 = vmul.f32 %v104, %v83
  %v111 = vmul.f32 %v105, %v84
  %v112 = vmul.f32 %v106, %v85
  %v113 = vmul.f32 %v107, %v86
  %v114 = vmul.f32 %v108, %v87
  %v115 = vadd.f32 %v109, %v110
  %v116 = vadd.f32 %v115, %v111
  %v117 = vadd.f32 %v116, %v112
  %v118 = vadd.f32 %v117, %v113
  %v119 = vadd.f32 %v118, %v114
  %120 = vadd.xlane.f32.xlu0 %v119
  %v121 = vpop.xlane.xlu0 %120
  %v122 = vsub.f32 0.0, %v121
  %123 = vst.msk [vmem:[%s4] sm:$0xff] %vm101, %v122
  %s124 = scalar_lea.vmem %s2, 48
  %v125 = vld [vmem:[%s124] sm:$0xff]
  %v126 = vld [vmem:[%s124 + $0x8] sm:$0xff]
  %v127 = vld [vmem:[%s124 + $0x10] sm:$0xff]
  %v128 = vld [vmem:[%s124 + $0x18] sm:$0xff]
  %v129 = vld [vmem:[%s124 + $0x20] sm:$0xff]
  %v130 = vld [vmem:[%s124 + $0x28] sm:$0xff]
  %v131 = vmul.f32 %v103, %v125
  %v132 = vmul.f32 %v104, %v126
  %v133 = vmul.f32 %v105, %v127
  %v134 = vmul.f32 %v106, %v128
  %v135 = vmul.f32 %v107, %v129
  %v136 = vmul.f32 %v108, %v130
  %v137 = vadd.f32 %v131, %v132
  %v138 = vadd.f32 %v137, %v133
  %v139 = vadd.f32 %v138, %v134
  %v140 = vadd.f32 %v139, %v135
  %v141 = vadd.f32 %v140, %v136
  %142 = vadd.xlane.f32.xlu0 %v141
  %v143 = vpop.xlane.xlu0 %142
  %v144 = vsub.f32 0.0, %v143
  %vm145 = vcmask 15368
  %146 = vst.msk [vmem:[%s4] sm:$0xff] %vm145, %v144
  %vm147 = vcmask 48168
  %148 = vst.msk [vmem:[%s4] sm:$0xff] %vm147, %v144
  %s149 = scalar_lea.vmem %s2, 96
  %v150 = vld [vmem:[%s149] sm:$0xff]
  %v151 = vld [vmem:[%s149 + $0x8] sm:$0xff]
  %v152 = vld [vmem:[%s149 + $0x10] sm:$0xff]
  %v153 = vld [vmem:[%s149 + $0x18] sm:$0xff]
  %v154 = vld [vmem:[%s149 + $0x20] sm:$0xff]
  %v155 = vld [vmem:[%s149 + $0x28] sm:$0xff]
  %v156 = vmul.f32 %v103, %v150
  %v157 = vmul.f32 %v104, %v151
  %v158 = vmul.f32 %v105, %v152
  %v159 = vmul.f32 %v106, %v153
  %v160 = vmul.f32 %v107, %v154
  %v161 = vmul.f32 %v108, %v155
  %v162 = vadd.f32 %v156, %v157
  %v163 = vadd.f32 %v162, %v158
  %v164 = vadd.f32 %v163, %v159
  %v165 = vadd.f32 %v164, %v160
  %v166 = vadd.f32 %v165, %v161
  %167 = vadd.xlane.f32.xlu0 %v166
  %v168 = vpop.xlane.xlu0 %167
  %v169 = vsub.f32 0.0, %v168
  %vm170 = vcmask 23568
  %171 = vst.msk [vmem:[%s4] sm:$0xff] %vm170, %v169
  %vm172 = vcmask 89168
  %173 = vst.msk [vmem:[%s4] sm:$0xff] %vm172, %v169
  %s174 = scalar_lea.vmem %s2, 144
  %v175 = vld [vmem:[%s174] sm:$0xff]
  %v176 = vld [vmem:[%s174 + $0x8] sm:$0xff]
  %v177 = vld [vmem:[%s174 + $0x10] sm:$0xff]
  %v178 = vld [vmem:[%s174 + $0x18] sm:$0xff]
  %v179 = vld [vmem:[%s174 + $0x20] sm:$0xff]
  %v180 = vld [vmem:[%s174 + $0x28] sm:$0xff]
  %v181 = vmul.f32 %v103, %v175
  %v182 = vmul.f32 %v104, %v176
  %v183 = vmul.f32 %v105, %v177
  %v184 = vmul.f32 %v106, %v178
  %v185 = vmul.f32 %v107, %v179
  %v186 = vmul.f32 %v108, %v180
  %v187 = vadd.f32 %v181, %v182
  %v188 = vadd.f32 %v187, %v183
  %v189 = vadd.f32 %v188, %v184
  %v190 = vadd.f32 %v189, %v185
  %v191 = vadd.f32 %v190, %v186
  %192 = vadd.xlane.f32.xlu0 %v191
  %v193 = vpop.xlane.xlu0 %192
  %v194 = vsub.f32 0.0, %v193
  %vm195 = vcmask 31768
  %196 = vst.msk [vmem:[%s4] sm:$0xff] %vm195, %v194
  %vm197 = vcmask 130168
  %198 = vst.msk [vmem:[%s4] sm:$0xff] %vm197, %v194
  %s199 = scalar_lea.vmem %s2, 192
  %v200 = vld [vmem:[%s199] sm:$0xff]
  %v201 = vld [vmem:[%s199 + $0x8] sm:$0xff]
  %v202 = vld [vmem:[%s199 + $0x10] sm:$0xff]
  %v203 = vld [vmem:[%s199 + $0x18] sm:$0xff]
  %v204 = vld [vmem:[%s199 + $0x20] sm:$0xff]
  %v205 = vld [vmem:[%s199 + $0x28] sm:$0xff]
  %v206 = vmul.f32 %v103, %v200
  %v207 = vmul.f32 %v104, %v201
  %v208 = vmul.f32 %v105, %v202
  %v209 = vmul.f32 %v106, %v203
  %v210 = vmul.f32 %v107, %v204
  %v211 = vmul.f32 %v108, %v205
  %v212 = vadd.f32 %v206, %v207
  %v213 = vadd.f32 %v212, %v208
  %v214 = vadd.f32 %v213, %v209
  %v215 = vadd.f32 %v214, %v210
  %v216 = vadd.f32 %v215, %v211
  %217 = vadd.xlane.f32.xlu0 %v216
  %v218 = vpop.xlane.xlu0 %217
  %v219 = vsub.f32 0.0, %v218
  %vm220 = vcmask 39968
  %221 = vst.msk [vmem:[%s4] sm:$0xff] %vm220, %v219
  %vm222 = vcmask 171168
  %223 = vst.msk [vmem:[%s4] sm:$0xff] %vm222, %v219
  %v224 = vld [vmem:[%s124] sm:$0xff]
  %v225 = vld [vmem:[%s124 + $0x8] sm:$0xff]
  %v226 = vld [vmem:[%s124 + $0x10] sm:$0xff]
  %v227 = vld [vmem:[%s124 + $0x18] sm:$0xff]
  %v228 = vld [vmem:[%s124 + $0x20] sm:$0xff]
  %v229 = vld [vmem:[%s124 + $0x28] sm:$0xff]
  %v230 = vmul.f32 %v64, %v224
  %v231 = vmul.f32 %v65, %v225
  %v232 = vmul.f32 %v66, %v226
  %v233 = vmul.f32 %v67, %v227
  %v234 = vmul.f32 %v68, %v228
  %v235 = vmul.f32 %v69, %v229
  %v236 = vadd.f32 %v230, %v231
  %v237 = vadd.f32 %v236, %v232
  %v238 = vadd.f32 %v237, %v233
  %v239 = vadd.f32 %v238, %v234
  %v240 = vadd.f32 %v239, %v235
  %241 = vadd.xlane.f32.xlu0 %v240
  %v242 = vpop.xlane.xlu0 %241
  %243 = vst.msk [vmem:[%s3] sm:$0xff] %vm145, %v242
  %v244 = vmul.f32 %v76, %v224
  %v245 = vmul.f32 %v77, %v225
  %v246 = vmul.f32 %v78, %v226
  %v247 = vmul.f32 %v79, %v227
  %v248 = vmul.f32 %v80, %v228
  %v249 = vmul.f32 %v81, %v229
  %v250 = vmul.f32 %v244, %v224
  %v251 = vmul.f32 %v245, %v225
  %v252 = vmul.f32 %v246, %v226
  %v253 = vmul.f32 %v247, %v227
  %v254 = vmul.f32 %v248, %v228
  %v255 = vmul.f32 %v249, %v229
  %v256 = vadd.f32 %v250, %v251
  %v257 = vadd.f32 %v256, %v252
  %v258 = vadd.f32 %v257, %v253
  %v259 = vadd.f32 %v258, %v254
  %v260 = vadd.f32 %v259, %v255
  %261 = vadd.xlane.f32.xlu0 %v260
  %v262 = vpop.xlane.xlu0 %261
  %v263 = vsub.f32 0.0, %v262
  %vm264 = vcmask 56368
  %265 = vst.msk [vmem:[%s4] sm:$0xff] %vm264, %v263
  %v266 = vld [vmem:[%s149] sm:$0xff]
  %v267 = vld [vmem:[%s149 + $0x8] sm:$0xff]
  %v268 = vld [vmem:[%s149 + $0x10] sm:$0xff]
  %v269 = vld [vmem:[%s149 + $0x18] sm:$0xff]
  %v270 = vld [vmem:[%s149 + $0x20] sm:$0xff]
  %v271 = vld [vmem:[%s149 + $0x28] sm:$0xff]
  %v272 = vmul.f32 %v244, %v266
  %v273 = vmul.f32 %v245, %v267
  %v274 = vmul.f32 %v246, %v268
  %v275 = vmul.f32 %v247, %v269
  %v276 = vmul.f32 %v248, %v270
  %v277 = vmul.f32 %v249, %v271
  %v278 = vadd.f32 %v272, %v273
  %v279 = vadd.f32 %v278, %v274
  %v280 = vadd.f32 %v279, %v275
  %v281 = vadd.f32 %v280, %v276
  %v282 = vadd.f32 %v281, %v277
  %283 = vadd.xlane.f32.xlu0 %v282
  %v284 = vpop.xlane.xlu0 %283
  %v285 = vsub.f32 0.0, %v284
  %vm286 = vcmask 64568
  %287 = vst.msk [vmem:[%s4] sm:$0xff] %vm286, %v285
  %vm288 = vcmask 97368
  %289 = vst.msk [vmem:[%s4] sm:$0xff] %vm288, %v285
  %v290 = vld [vmem:[%s174] sm:$0xff]
  %v291 = vld [vmem:[%s174 + $0x8] sm:$0xff]
  %v292 = vld [vmem:[%s174 + $0x10] sm:$0xff]
  %v293 = vld [vmem:[%s174 + $0x18] sm:$0xff]
  %v294 = vld [vmem:[%s174 + $0x20] sm:$0xff]
  %v295 = vld [vmem:[%s174 + $0x28] sm:$0xff]
  %v296 = vmul.f32 %v244, %v290
  %v297 = vmul.f32 %v245, %v291
  %v298 = vmul.f32 %v246, %v292
  %v299 = vmul.f32 %v247, %v293
  %v300 = vmul.f32 %v248, %v294
  %v301 = vmul.f32 %v249, %v295
  %v302 = vadd.f32 %v296, %v297
  %v303 = vadd.f32 %v302, %v298
  %v304 = vadd.f32 %v303, %v299
  %v305 = vadd.f32 %v304, %v300
  %v306 = vadd.f32 %v305, %v301
  %307 = vadd.xlane.f32.xlu0 %v306
  %v308 = vpop.xlane.xlu0 %307
  %v309 = vsub.f32 0.0, %v308
  %vm310 = vcmask 72768
  %311 = vst.msk [vmem:[%s4] sm:$0xff] %vm310, %v309
  %vm312 = vcmask 138368
  %313 = vst.msk [vmem:[%s4] sm:$0xff] %vm312, %v309
  %v314 = vld [vmem:[%s199] sm:$0xff]
  %v315 = vld [vmem:[%s199 + $0x8] sm:$0xff]
  %v316 = vld [vmem:[%s199 + $0x10] sm:$0xff]
  %v317 = vld [vmem:[%s199 + $0x18] sm:$0xff]
  %v318 = vld [vmem:[%s199 + $0x20] sm:$0xff]
  %v319 = vld [vmem:[%s199 + $0x28] sm:$0xff]
  %v320 = vmul.f32 %v244, %v314
  %v321 = vmul.f32 %v245, %v315
  %v322 = vmul.f32 %v246, %v316
  %v323 = vmul.f32 %v247, %v317
  %v324 = vmul.f32 %v248, %v318
  %v325 = vmul.f32 %v249, %v319
  %v326 = vadd.f32 %v320, %v321
  %v327 = vadd.f32 %v326, %v322
  %v328 = vadd.f32 %v327, %v323
  %v329 = vadd.f32 %v328, %v324
  %v330 = vadd.f32 %v329, %v325
  %331 = vadd.xlane.f32.xlu0 %v330
  %v332 = vpop.xlane.xlu0 %331
  %v333 = vsub.f32 0.0, %v332
  %vm334 = vcmask 80968
  %335 = vst.msk [vmem:[%s4] sm:$0xff] %vm334, %v333
  %vm336 = vcmask 179368
  %337 = vst.msk [vmem:[%s4] sm:$0xff] %vm336, %v333
  %v338 = vld [vmem:[%s149] sm:$0xff]
  %v339 = vld [vmem:[%s149 + $0x8] sm:$0xff]
  %v340 = vld [vmem:[%s149 + $0x10] sm:$0xff]
  %v341 = vld [vmem:[%s149 + $0x18] sm:$0xff]
  %v342 = vld [vmem:[%s149 + $0x20] sm:$0xff]
  %v343 = vld [vmem:[%s149 + $0x28] sm:$0xff]
  %v344 = vmul.f32 %v64, %v338
  %v345 = vmul.f32 %v65, %v339
  %v346 = vmul.f32 %v66, %v340
  %v347 = vmul.f32 %v67, %v341
  %v348 = vmul.f32 %v68, %v342
  %v349 = vmul.f32 %v69, %v343
  %v350 = vadd.f32 %v344, %v345
  %v351 = vadd.f32 %v350, %v346
  %v352 = vadd.f32 %v351, %v347
  %v353 = vadd.f32 %v352, %v348
  %v354 = vadd.f32 %v353, %v349
  %355 = vadd.xlane.f32.xlu0 %v354
  %v356 = vpop.xlane.xlu0 %355
  %357 = vst.msk [vmem:[%s3] sm:$0xff] %vm170, %v356
  %v358 = vmul.f32 %v76, %v338
  %v359 = vmul.f32 %v77, %v339
  %v360 = vmul.f32 %v78, %v340
  %v361 = vmul.f32 %v79, %v341
  %v362 = vmul.f32 %v80, %v342
  %v363 = vmul.f32 %v81, %v343
  %v364 = vmul.f32 %v358, %v338
  %v365 = vmul.f32 %v359, %v339
  %v366 = vmul.f32 %v360, %v340
  %v367 = vmul.f32 %v361, %v341
  %v368 = vmul.f32 %v362, %v342
  %v369 = vmul.f32 %v363, %v343
  %v370 = vadd.f32 %v364, %v365
  %v371 = vadd.f32 %v370, %v366
  %v372 = vadd.f32 %v371, %v367
  %v373 = vadd.f32 %v372, %v368
  %v374 = vadd.f32 %v373, %v369
  %375 = vadd.xlane.f32.xlu0 %v374
  %v376 = vpop.xlane.xlu0 %375
  %v377 = vsub.f32 0.0, %v376
  %vm378 = vcmask 105568
  %379 = vst.msk [vmem:[%s4] sm:$0xff] %vm378, %v377
  %v380 = vld [vmem:[%s174] sm:$0xff]
  %v381 = vld [vmem:[%s174 + $0x8] sm:$0xff]
  %v382 = vld [vmem:[%s174 + $0x10] sm:$0xff]
  %v383 = vld [vmem:[%s174 + $0x18] sm:$0xff]
  %v384 = vld [vmem:[%s174 + $0x20] sm:$0xff]
  %v385 = vld [vmem:[%s174 + $0x28] sm:$0xff]
  %v386 = vmul.f32 %v358, %v380
  %v387 = vmul.f32 %v359, %v381
  %v388 = vmul.f32 %v360, %v382
  %v389 = vmul.f32 %v361, %v383
  %v390 = vmul.f32 %v362, %v384
  %v391 = vmul.f32 %v363, %v385
  %v392 = vadd.f32 %v386, %v387
  %v393 = vadd.f32 %v392, %v388
  %v394 = vadd.f32 %v393, %v389
  %v395 = vadd.f32 %v394, %v390
  %v396 = vadd.f32 %v395, %v391
  %397 = vadd.xlane.f32.xlu0 %v396
  %v398 = vpop.xlane.xlu0 %397
  %v399 = vsub.f32 0.0, %v398
  %vm400 = vcmask 113768
  %401 = vst.msk [vmem:[%s4] sm:$0xff] %vm400, %v399
  %vm402 = vcmask 146568
  %403 = vst.msk [vmem:[%s4] sm:$0xff] %vm402, %v399
  %v404 = vld [vmem:[%s199] sm:$0xff]
  %v405 = vld [vmem:[%s199 + $0x8] sm:$0xff]
  %v406 = vld [vmem:[%s199 + $0x10] sm:$0xff]
  %v407 = vld [vmem:[%s199 + $0x18] sm:$0xff]
  %v408 = vld [vmem:[%s199 + $0x20] sm:$0xff]
  %v409 = vld [vmem:[%s199 + $0x28] sm:$0xff]
  %v410 = vmul.f32 %v358, %v404
  %v411 = vmul.f32 %v359, %v405
  %v412 = vmul.f32 %v360, %v406
  %v413 = vmul.f32 %v361, %v407
  %v414 = vmul.f32 %v362, %v408
  %v415 = vmul.f32 %v363, %v409
  %v416 = vadd.f32 %v410, %v411
  %v417 = vadd.f32 %v416, %v412
  %v418 = vadd.f32 %v417, %v413
  %v419 = vadd.f32 %v418, %v414
  %v420 = vadd.f32 %v419, %v415
  %421 = vadd.xlane.f32.xlu0 %v420
  %v422 = vpop.xlane.xlu0 %421
  %v423 = vsub.f32 0.0, %v422
  %vm424 = vcmask 121968
  %425 = vst.msk [vmem:[%s4] sm:$0xff] %vm424, %v423
  %vm426 = vcmask 187568
  %427 = vst.msk [vmem:[%s4] sm:$0xff] %vm426, %v423
  %v428 = vld [vmem:[%s174] sm:$0xff]
  %v429 = vld [vmem:[%s174 + $0x8] sm:$0xff]
  %v430 = vld [vmem:[%s174 + $0x10] sm:$0xff]
  %v431 = vld [vmem:[%s174 + $0x18] sm:$0xff]
  %v432 = vld [vmem:[%s174 + $0x20] sm:$0xff]
  %v433 = vld [vmem:[%s174 + $0x28] sm:$0xff]
  %v434 = vmul.f32 %v64, %v428
  %v435 = vmul.f32 %v65, %v429
  %v436 = vmul.f32 %v66, %v430
  %v437 = vmul.f32 %v67, %v431
  %v438 = vmul.f32 %v68, %v432
  %v439 = vmul.f32 %v69, %v433
  %v440 = vadd.f32 %v434, %v435
  %v441 = vadd.f32 %v440, %v436
  %v442 = vadd.f32 %v441, %v437
  %v443 = vadd.f32 %v442, %v438
  %v444 = vadd.f32 %v443, %v439
  %445 = vadd.xlane.f32.xlu0 %v444
  %v446 = vpop.xlane.xlu0 %445
  %447 = vst.msk [vmem:[%s3] sm:$0xff] %vm195, %v446
  %v448 = vmul.f32 %v76, %v428
  %v449 = vmul.f32 %v77, %v429
  %v450 = vmul.f32 %v78, %v430
  %v451 = vmul.f32 %v79, %v431
  %v452 = vmul.f32 %v80, %v432
  %v453 = vmul.f32 %v81, %v433
  %v454 = vmul.f32 %v448, %v428
  %v455 = vmul.f32 %v449, %v429
  %v456 = vmul.f32 %v450, %v430
  %v457 = vmul.f32 %v451, %v431
  %v458 = vmul.f32 %v452, %v432
  %v459 = vmul.f32 %v453, %v433
  %v460 = vadd.f32 %v454, %v455
  %v461 = vadd.f32 %v460, %v456
  %v462 = vadd.f32 %v461, %v457
  %v463 = vadd.f32 %v462, %v458
  %v464 = vadd.f32 %v463, %v459
  %465 = vadd.xlane.f32.xlu0 %v464
  %v466 = vpop.xlane.xlu0 %465
  %v467 = vsub.f32 0.0, %v466
  %vm468 = vcmask 154768
  %469 = vst.msk [vmem:[%s4] sm:$0xff] %vm468, %v467
  %v470 = vld [vmem:[%s199] sm:$0xff]
  %v471 = vld [vmem:[%s199 + $0x8] sm:$0xff]
  %v472 = vld [vmem:[%s199 + $0x10] sm:$0xff]
  %v473 = vld [vmem:[%s199 + $0x18] sm:$0xff]
  %v474 = vld [vmem:[%s199 + $0x20] sm:$0xff]
  %v475 = vld [vmem:[%s199 + $0x28] sm:$0xff]
  %v476 = vmul.f32 %v448, %v470
  %v477 = vmul.f32 %v449, %v471
  %v478 = vmul.f32 %v450, %v472
  %v479 = vmul.f32 %v451, %v473
  %v480 = vmul.f32 %v452, %v474
  %v481 = vmul.f32 %v453, %v475
  %v482 = vadd.f32 %v476, %v477
  %v483 = vadd.f32 %v482, %v478
  %v484 = vadd.f32 %v483, %v479
  %v485 = vadd.f32 %v484, %v480
  %v486 = vadd.f32 %v485, %v481
  %487 = vadd.xlane.f32.xlu0 %v486
  %v488 = vpop.xlane.xlu0 %487
  %v489 = vsub.f32 0.0, %v488
  %vm490 = vcmask 162968
  %491 = vst.msk [vmem:[%s4] sm:$0xff] %vm490, %v489
  %vm492 = vcmask 195768
  %493 = vst.msk [vmem:[%s4] sm:$0xff] %vm492, %v489
  %v494 = vld [vmem:[%s199] sm:$0xff]
  %v495 = vld [vmem:[%s199 + $0x8] sm:$0xff]
  %v496 = vld [vmem:[%s199 + $0x10] sm:$0xff]
  %v497 = vld [vmem:[%s199 + $0x18] sm:$0xff]
  %v498 = vld [vmem:[%s199 + $0x20] sm:$0xff]
  %v499 = vld [vmem:[%s199 + $0x28] sm:$0xff]
  %v500 = vmul.f32 %v64, %v494
  %v501 = vmul.f32 %v65, %v495
  %v502 = vmul.f32 %v66, %v496
  %v503 = vmul.f32 %v67, %v497
  %v504 = vmul.f32 %v68, %v498
  %v505 = vmul.f32 %v69, %v499
  %v506 = vadd.f32 %v500, %v501
  %v507 = vadd.f32 %v506, %v502
  %v508 = vadd.f32 %v507, %v503
  %v509 = vadd.f32 %v508, %v504
  %v510 = vadd.f32 %v509, %v505
  %511 = vadd.xlane.f32.xlu0 %v510
  %v512 = vpop.xlane.xlu0 %511
  %513 = vst.msk [vmem:[%s3] sm:$0xff] %vm220, %v512
  %v514 = vmul.f32 %v76, %v494
  %v515 = vmul.f32 %v77, %v495
  %v516 = vmul.f32 %v78, %v496
  %v517 = vmul.f32 %v79, %v497
  %v518 = vmul.f32 %v80, %v498
  %v519 = vmul.f32 %v81, %v499
  %v520 = vmul.f32 %v514, %v494
  %v521 = vmul.f32 %v515, %v495
  %v522 = vmul.f32 %v516, %v496
  %v523 = vmul.f32 %v517, %v497
  %v524 = vmul.f32 %v518, %v498
  %v525 = vmul.f32 %v519, %v499
  %v526 = vadd.f32 %v520, %v521
  %v527 = vadd.f32 %v526, %v522
  %v528 = vadd.f32 %v527, %v523
  %v529 = vadd.f32 %v528, %v524
  %v530 = vadd.f32 %v529, %v525
  %531 = vadd.xlane.f32.xlu0 %v530
  %v532 = vpop.xlane.xlu0 %531
  %v533 = vsub.f32 0.0, %v532
  %vm534 = vcmask 203968
  %535 = vst.msk [vmem:[%s4] sm:$0xff] %vm534, %v533
  // Predicated region
  $region14: #{forward.6} parent=0 // pred_check
    _
  $region15: #{forward.6} parent=0 // pred_check_branch
    %537 = sbr.rel (0) target = $region17
  $region16: #{forward.6} parent=0 // pred_region
    _
  $region17: #{forward.6} parent=0 // pred_fallthru
    _
  // Predicated region
  $region18: #{forward.6} parent=0 // pred_check
    _
  $region19: #{forward.6} parent=0 // pred_check_branch
    %539 = sbr.rel (0) target = $region21
  $region20: #{forward.6} parent=0 // pred_region
    _
  $region21: #{forward.6} parent=0 // pred_fallthru
    _
  // Predicated region
  $region22: #{forward.6} parent=0 // pred_check
    _
  $region23: #{forward.6} parent=0 // pred_check_branch
    %541 = sbr.rel (0) target = $region25
  $region24: #{forward.6} parent=0 // pred_region
    _
  $region25: #{forward.6} parent=0 // pred_fallthru
    _
  // Predicated region
  $region26: #{forward.6} parent=0 // pred_check
    _
  $region27: #{forward.6} parent=0 // pred_check_branch
    %543 = sbr.rel (0) target = $region29
  $region28: #{forward.6} parent=0 // pred_region
    _
  $region29: #{forward.6} parent=0 // pred_fallthru
    _

</llo_original>
